<compile_context>
chip_gen: v6e
topology: v6e:2x2x1
jax: 0.10.0
libtpu: 0.0.40
codegen_flags: <defaults>
</compile_context>

<pallas_src>
import jax
import jax.numpy as jnp
from jax.experimental import pallas as pl
from jax.experimental.pallas import tpu as pltpu

EPS_BN = 1e-5
EPS_LN = 1e-5


def _gelu(x):
    # TODO(synk): nn.GELU() default is the exact erf form; tanh approximation
    # used here for guaranteed TPU lowering (max abs diff ~1e-3).
    c = 0.7978845608028654  # sqrt(2/pi)
    return 0.5 * x * (1.0 + jnp.tanh(c * (x + 0.044715 * x * x * x)))


# --------------------------- fused kernel -----------------------------------
def classifier_v2_kernel(xv_ref, xl_ref,
                         s1_ref, t1_ref, dw1_ref, db1_ref, dw2_ref, db2_ref,
                         s2_ref, t2_ref, fw1_ref, fb1_ref, fw2_ref, fb2_ref,
                         lng_ref, lnb_ref, fc1w_ref, fc1b_ref, fc2w_ref, fc2b_ref,
                         o_ref, xall_scr):
    # Shapes (per grid step, bb = batch rows handled by this step):
    #   xv_ref  : (bb, Nv, d_llm)     xl_ref  : (bb, Nl, d_ff)
    #   xall_scr: (N, bb*d_ff)        o_ref   : (1, bb, TW_PAD)
    bb, Nv, _ = xv_ref.shape
    Nl = xl_ref.shape[1]
    N = Nv + Nl
    d_ff = dw1_ref.shape[1]

    s1 = s1_ref[...]            # (Nv, 1)  BN1 (eval) scale
    t1 = t1_ref[...]            # (Nv, 1)  BN1 (eval) shift
    s2 = s2_ref[...]            # (N, 1)   BN2 (eval) scale
    t2 = t2_ref[...]            # (N, 1)   BN2 (eval) shift
    w1t = dw1_ref[...]          # (d_llm, d_ff)
    b1 = db1_ref[...]           # (1, d_ff)
    w2t = dw2_ref[...]          # (d_ff, d_ff)
    b2 = db2_ref[...]           # (1, d_ff)

    # ---- Phase 1: Dimension_Mixing + BN2, stacked along lanes into scratch --
    # TODO(synk): bb is small here so a static unrolled loop is fine; at large
    # production batch blocks switch this to a single (bb*Nv, d_llm) matmul.
    for b in range(bb):
        xb = xv_ref[b] * s1 + t1                                       # (Nv, d_llm)
        h = jnp.dot(xb, w1t, preferred_element_type=jnp.float32) + b1
        h = jnp.maximum(h, 0.0)                                        # ReLU
        v = jnp.dot(h, w2t, preferred_element_type=jnp.float32) + b2   # (Nv, d_ff)
        c0, c1 = b * d_ff, (b + 1) * d_ff
        # BN2 (eval) is per-N-channel -> applies row-wise regardless of column
        xall_scr[0:Nv, c0:c1] = v * s2[0:Nv, :] + t2[0:Nv, :]
        xall_scr[Nv:N, c0:c1] = xl_ref[b] * s2[Nv:N, :] + t2[Nv:N, :]

    # ---- Phase 2: Feature_Mixing, batched over the whole batch block --------
    # Transpose-free form: columns of the (N, bb*d_ff) slab are the lanes,
    # so one W3 / one W4 matmul serves every sample in the block.
    xn_all = xall_scr[...]                                             # (N, bb*d_ff)
    h_all = jnp.dot(fw1_ref[...], xn_all,
                    preferred_element_type=jnp.float32) + fb1_ref[...]  # (d_ff, bb*d_ff)
    h_all = jnp.maximum(h_all, 0.0)                                    # ReLU
    y_all = jnp.dot(fw2_ref[...], h_all,
                    preferred_element_type=jnp.float32) + fb2_ref[...]  # (N, bb*d_ff)
    r_all = xn_all + y_all          # residual uses the *normalized* x_proj

    # ---- Phase 3: head (LayerNorm over N*d_ff, GELU, fc_1, GELU, fc_2) ------
    lng = lng_ref[...]              # (N, d_ff)  == ln_gamma.reshape(N, d_ff)
    lnb = lnb_ref[...]              # (N, d_ff)
    gs = []
    for b in range(bb):
        r = r_all[:, b * d_ff:(b + 1) * d_ff]                          # (N, d_ff)
        mu = jnp.mean(r, keepdims=True)                                # (1, 1)
        var = jnp.mean((r - mu) ** 2, keepdims=True)                   # biased, like LN
        xn = (r - mu) * jax.lax.rsqrt(var + EPS_LN) * lng + lnb
        gs.append(_gelu(xn))                                           # (N, d_ff)

    # fc_1: contract over F = N*d_ff as a sum over N of (bb,d_ff)@(d_ff,d_ff)
    # (weight pre-viewed as (N, d_ff, d_ff) -> naturally chunked contraction).
    z = jnp.zeros((bb, d_ff), jnp.float32)
    for n in range(N):
        if bb == 1:
            gn = gs[0][n:n + 1, :]                                     # (1, d_ff)
        else:
            gn = jnp.concatenate([g[n:n + 1, :] for g in gs], axis=0)  # (bb, d_ff)
        z = z + jnp.dot(gn, fc1w_ref[n], preferred_element_type=jnp.float32)
    z = z + fc1b_ref[...]
    g2 = _gelu(z)                                                      # (bb, d_ff)

    out = jnp.dot(g2, fc2w_ref[...],
                  preferred_element_type=jnp.float32) + fc2b_ref[...]   # (bb, TW_PAD)
    o_ref[0] = out.astype(o_ref.dtype)                                 # lane-dense store


# --------------------------- parameters -------------------------------------
def init_params(key, N, N_vital, d_llm, d_ff, target_window):
    """PyTorch-layout parameters (Linear weights are (out, in))."""
    ks = jax.random.split(key, 22)
    nrm = lambda k, shape, s=0.1: s * jax.random.normal(k, shape, jnp.float32)
    F = N * d_ff
    p = {}
    # Dimension_Mixing: BatchNorm2d(N_vital), Linear(d_llm,d_ff), Linear(d_ff,d_ff)
    p['bn1_gamma'] = 1.0 + nrm(ks[0], (N_vital,))
    p['bn1_beta'] = nrm(ks[1], (N_vital,))
    p['bn1_mean'] = nrm(ks[2], (N_vital,))
    p['bn1_var'] = 1.0 + jnp.abs(nrm(ks[3], (N_vital,)))
    p['dm_w1'] = nrm(ks[4], (d_ff, d_llm))
    p['dm_b1'] = nrm(ks[5], (d_ff,))
    p['dm_w2'] = nrm(ks[6], (d_ff, d_ff))
    p['dm_b2'] = nrm(ks[7], (d_ff,))
    # Feature_Mixing: BatchNorm2d(N), Linear(N,d_ff), Linear(d_ff,N)
    p['bn2_gamma'] = 1.0 + nrm(ks[8], (N,))
    p['bn2_beta'] = nrm(ks[9], (N,))
    p['bn2_mean'] = nrm(ks[10], (N,))
    p['bn2_var'] = 1.0 + jnp.abs(nrm(ks[11], (N,)))
    p['fm_w1'] = nrm(ks[12], (d_ff, N))
    p['fm_b1'] = nrm(ks[13], (d_ff,))
    p['fm_w2'] = nrm(ks[14], (N, d_ff))
    p['fm_b2'] = nrm(ks[15], (N,))
    # Head: LayerNorm(N*d_ff), Linear(N*d_ff, d_ff), Linear(d_ff, target_window)
    p['ln_gamma'] = 1.0 + nrm(ks[16], (F,))
    p['ln_beta'] = nrm(ks[17], (F,))
    p['fc1_w'] = nrm(ks[18], (d_ff, F))
    p['fc1_b'] = nrm(ks[19], (d_ff,))
    p['fc2_w'] = nrm(ks[20], (target_window, d_ff))
    p['fc2_b'] = nrm(ks[21], (target_window,))
    return p


def prepare_params(p, N, N_vital, d_ff, target_window):
    """One-time transforms: BN folding, weight transposes/reshapes, fc2 lane pad."""
    s1 = p['bn1_gamma'] / jnp.sqrt(p['bn1_var'] + EPS_BN)
    t1 = p['bn1_beta'] - p['bn1_mean'] * s1
    s2 = p['bn2_gamma'] / jnp.sqrt(p['bn2_var'] + EPS_BN)
    t2 = p['bn2_beta'] - p['bn2_mean'] * s2
    tw = target_window
    tw_pad = max(128, ((tw + 127) // 128) * 128)       # lane-dense output store
    fc2_wt_pad = jnp.zeros((d_ff, tw_pad), jnp.float32).at[:, :tw].set(p['fc2_w'].T)
    fc2_b_pad = jnp.zeros((1, tw_pad), jnp.float32).at[0, :tw].set(p['fc2_b'])
    return dict(
        s1=s1.reshape(N_vital, 1), t1=t1.reshape(N_vital, 1),
        dm_w1t=p['dm_w1'].T, dm_b1=p['dm_b1'].reshape(1, d_ff),
        dm_w2t=p['dm_w2'].T, dm_b2=p['dm_b2'].reshape(1, d_ff),
        s2=s2.reshape(N, 1), t2=t2.reshape(N, 1),
        fm_w1=p['fm_w1'], fm_b1=p['fm_b1'].reshape(d_ff, 1),
        fm_w2=p['fm_w2'], fm_b2=p['fm_b2'].reshape(N, 1),
        ln_g2d=p['ln_gamma'].reshape(N, d_ff), ln_b2d=p['ln_beta'].reshape(N, d_ff),
        fc1_w3d=p['fc1_w'].T.reshape(N, d_ff, d_ff), fc1_b=p['fc1_b'].reshape(1, d_ff),
        fc2_wt_pad=fc2_wt_pad, fc2_b_pad=fc2_b_pad,
        tw=tw, tw_pad=tw_pad)


# --------------------------- forward wrapper --------------------------------
def classifier_v2_forward(prep, x_vital, x_lab, num_blocks=None):
    B, Nv, d_llm = x_vital.shape
    _, Nl, d_ff = x_lab.shape
    N = Nv + Nl
    tw, tw_pad = prep['tw'], prep['tw_pad']

    if num_blocks is None:                      # split batch across 2 TCs when possible
        num_blocks = 2 if (B >= 2 and B % 2 == 0) else 1
    assert B % num_blocks == 0
    bb = B // num_blocks
    G = num_blocks

    const2 = lambda i: (0, 0)
    out = pl.pallas_call(
        classifier_v2_kernel,
        out_shape=jax.ShapeDtypeStruct((G, bb, tw_pad), jnp.float32),
        grid=(G,),
        in_specs=[
            pl.BlockSpec((bb, Nv, d_llm), lambda i: (i, 0, 0)),   # x_vital block
            pl.BlockSpec((bb, Nl, d_ff), lambda i: (i, 0, 0)),    # x_lab block
            pl.BlockSpec((Nv, 1), const2),                        # BN1 scale
            pl.BlockSpec((Nv, 1), const2),                        # BN1 shift
            pl.BlockSpec((d_llm, d_ff), const2),                  # dm fc1 W^T
            pl.BlockSpec((1, d_ff), const2),                      # dm fc1 b
            pl.BlockSpec((d_ff, d_ff), const2),                   # dm fc2 W^T
            pl.BlockSpec((1, d_ff), const2),                      # dm fc2 b
            pl.BlockSpec((N, 1), const2),                         # BN2 scale
            pl.BlockSpec((N, 1), const2),                         # BN2 shift
            pl.BlockSpec((d_ff, N), const2),                      # fm fc1 W
            pl.BlockSpec((d_ff, 1), const2),                      # fm fc1 b (col)
            pl.BlockSpec((N, d_ff), const2),                      # fm fc2 W
            pl.BlockSpec((N, 1), const2),                         # fm fc2 b (col)
            pl.BlockSpec((N, d_ff), const2),                      # LN gamma (2D view)
            pl.BlockSpec((N, d_ff), const2),                      # LN beta  (2D view)
            pl.BlockSpec((N, d_ff, d_ff), lambda i: (0, 0, 0)),   # fc_1 W^T as (N,d_ff,d_ff)
            pl.BlockSpec((1, d_ff), const2),                      # fc_1 b
            pl.BlockSpec((d_ff, tw_pad), const2),                 # fc_2 W^T (lane-padded)
            pl.BlockSpec((1, tw_pad), const2),                    # fc_2 b   (lane-padded)
        ],
        out_specs=pl.BlockSpec((1, bb, tw_pad), lambda i: (i, 0, 0)),
        scratch_shapes=[pltpu.VMEM((N, bb * d_ff), jnp.float32)],
        compiler_params=pltpu.CompilerParams(dimension_semantics=("parallel",)),
    )(x_vital, x_lab,
      prep['s1'], prep['t1'], prep['dm_w1t'], prep['dm_b1'],
      prep['dm_w2t'], prep['dm_b2'], prep['s2'], prep['t2'],
      prep['fm_w1'], prep['fm_b1'], prep['fm_w2'], prep['fm_b2'],
      prep['ln_g2d'], prep['ln_b2d'], prep['fc1_w3d'], prep['fc1_b'],
      prep['fc2_wt_pad'], prep['fc2_b_pad'])

    return out.reshape(B, tw_pad)[:, :tw]


# --------------------------- pure-JAX reference (eval mode) -----------------
def reference_forward(p, x_vital, x_lab):
    s1 = p['bn1_gamma'] / jnp.sqrt(p['bn1_var'] + EPS_BN)
    t1 = p['bn1_beta'] - p['bn1_mean'] * s1
    xv = x_vital * s1[None, :, None] + t1[None, :, None]
    h = jnp.maximum(jnp.einsum('bnk,fk->bnf', xv, p['dm_w1']) + p['dm_b1'], 0.0)
    vital = jnp.einsum('bnf,gf->bng', h, p['dm_w2']) + p['dm_b2']
    total = jnp.concatenate([vital, x_lab], axis=1)
    s2 = p['bn2_gamma'] / jnp.sqrt(p['bn2_var'] + EPS_BN)
    t2 = p['bn2_beta'] - p['bn2_mean'] * s2
    xp = total * s2[None, :, None] + t2[None, :, None]
    xpp = jnp.transpose(xp, (0, 2, 1))                                 # (B, d_ff, N)
    h2 = jnp.maximum(jnp.einsum('bfn,gn->bfg', xpp, p['fm_w1']) + p['fm_b1'], 0.0)
    y = jnp.einsum('bfg,ng->bfn', h2, p['fm_w2']) + p['fm_b2']
    x_emb = jnp.transpose(xpp + y, (0, 2, 1))                          # (B, N, d_ff)
    x = x_emb.reshape(x_emb.shape[0], -1)
    mu = jnp.mean(x, axis=-1, keepdims=True)
    var = jnp.mean((x - mu) ** 2, axis=-1, keepdims=True)
    xn = (x - mu) * jax.lax.rsqrt(var + EPS_LN) * p['ln_gamma'] + p['ln_beta']
    g = _gelu(xn)
    z = g @ p['fc1_w'].T + p['fc1_b']
    return _gelu(z) @ p['fc2_w'].T + p['fc2_b']


if __name__ == "__main__":
    B, N, N_vital, d_llm, d_ff, tw = 2, 8, 4, 32, 32, 2
    N_lab = N - N_vital

    key = jax.random.PRNGKey(0)
    k_p, k_v, k_l = jax.random.split(key, 3)
    params = init_params(k_p, N, N_vital, d_llm, d_ff, tw)
    prep = prepare_params(params, N, N_vital, d_ff, tw)

    x_vital = jax.random.normal(k_v, (B, N_vital, d_llm), jnp.float32)
    x_lab = jax.random.normal(k_l, (B, N_lab, d_ff), jnp.float32)

    out = classifier_v2_forward(prep, x_vital, x_lab)
    jax.block_until_ready(out)
    assert out.shape == (B, tw) and out.dtype == jnp.float32

    ref = reference_forward(params, x_vital, x_lab)
    err = float(jnp.max(jnp.abs(out - ref)))
    assert err < 2e-2, f"max abs err vs reference: {err}"
    print("KERNEL_OK")
</pallas_src>

<mosaic_0001>
module attributes {stable_mosaic.version = 11 : i64} {
  func.func @classifier_v2_kernel(%arg0: i32, %arg1: memref<1x4x32xf32, #tpu.memory_space<vmem>>, %arg2: memref<1x4x32xf32, #tpu.memory_space<vmem>>, %arg3: memref<4x1xf32, #tpu.memory_space<vmem>>, %arg4: memref<4x1xf32, #tpu.memory_space<vmem>>, %arg5: memref<32x32xf32, #tpu.memory_space<vmem>>, %arg6: memref<1x32xf32, #tpu.memory_space<vmem>>, %arg7: memref<32x32xf32, #tpu.memory_space<vmem>>, %arg8: memref<1x32xf32, #tpu.memory_space<vmem>>, %arg9: memref<8x1xf32, #tpu.memory_space<vmem>>, %arg10: memref<8x1xf32, #tpu.memory_space<vmem>>, %arg11: memref<32x8xf32, #tpu.memory_space<vmem>>, %arg12: memref<32x1xf32, #tpu.memory_space<vmem>>, %arg13: memref<8x32xf32, #tpu.memory_space<vmem>>, %arg14: memref<8x1xf32, #tpu.memory_space<vmem>>, %arg15: memref<8x32xf32, #tpu.memory_space<vmem>>, %arg16: memref<8x32xf32, #tpu.memory_space<vmem>>, %arg17: memref<8x32x32xf32, #tpu.memory_space<vmem>>, %arg18: memref<1x32xf32, #tpu.memory_space<vmem>>, %arg19: memref<32x128xf32, #tpu.memory_space<vmem>>, %arg20: memref<1x128xf32, #tpu.memory_space<vmem>>, %arg21: memref<1x1x128xf32, #tpu.memory_space<vmem>>, %arg22: memref<8x32xf32, #tpu.memory_space<vmem>>) attributes {dimension_semantics = [#tpu.dimension_semantics<parallel>], iteration_bounds = array<i64: 2>, scalar_prefetch = 0 : i64, scratch_operands = 1 : i64, tpu.core_type = #tpu.core_type<tc>, window_params = [{transform_indices = @transform_0, window_bounds = array<i64: 1, 4, 32>}, {transform_indices = @transform_1, window_bounds = array<i64: 1, 4, 32>}, {pipeline_mode = #tpu.pipeline_mode<synchronous>, transform_indices = @transform_2, window_bounds = array<i64: 4, 1>}, {pipeline_mode = #tpu.pipeline_mode<synchronous>, transform_indices = @transform_3, window_bounds = array<i64: 4, 1>}, {pipeline_mode = #tpu.pipeline_mode<synchronous>, transform_indices = @transform_4, window_bounds = array<i64: 32, 32>}, {pipeline_mode = #tpu.pipeline_mode<synchronous>, transform_indices = @transform_5, window_bounds = array<i64: 1, 32>}, {pipeline_mode = #tpu.pipeline_mode<synchronous>, transform_indices = @transform_6, window_bounds = array<i64: 32, 32>}, {pipeline_mode = #tpu.pipeline_mode<synchronous>, transform_indices = @transform_7, window_bounds = array<i64: 1, 32>}, {pipeline_mode = #tpu.pipeline_mode<synchronous>, transform_indices = @transform_8, window_bounds = array<i64: 8, 1>}, {pipeline_mode = #tpu.pipeline_mode<synchronous>, transform_indices = @transform_9, window_bounds = array<i64: 8, 1>}, {pipeline_mode = #tpu.pipeline_mode<synchronous>, transform_indices = @transform_10, window_bounds = array<i64: 32, 8>}, {pipeline_mode = #tpu.pipeline_mode<synchronous>, transform_indices = @transform_11, window_bounds = array<i64: 32, 1>}, {pipeline_mode = #tpu.pipeline_mode<synchronous>, transform_indices = @transform_12, window_bounds = array<i64: 8, 32>}, {pipeline_mode = #tpu.pipeline_mode<synchronous>, transform_indices = @transform_13, window_bounds = array<i64: 8, 1>}, {pipeline_mode = #tpu.pipeline_mode<synchronous>, transform_indices = @transform_14, window_bounds = array<i64: 8, 32>}, {pipeline_mode = #tpu.pipeline_mode<synchronous>, transform_indices = @transform_15, window_bounds = array<i64: 8, 32>}, {pipeline_mode = #tpu.pipeline_mode<synchronous>, transform_indices = @transform_16, window_bounds = array<i64: 8, 32, 32>}, {pipeline_mode = #tpu.pipeline_mode<synchronous>, transform_indices = @transform_17, window_bounds = array<i64: 1, 32>}, {pipeline_mode = #tpu.pipeline_mode<synchronous>, transform_indices = @transform_18, window_bounds = array<i64: 32, 128>}, {pipeline_mode = #tpu.pipeline_mode<synchronous>, transform_indices = @transform_19, window_bounds = array<i64: 1, 128>}, {transform_indices = @transform_20, window_bounds = array<i64: 1, 1, 128>}]} {
    %c0 = arith.constant 0 : index
    %c0_0 = arith.constant 0 : index
    %0 = vector.load %arg3[%c0, %c0_0] : memref<4x1xf32, #tpu.memory_space<vmem>>, vector<4x1xf32>
    %c0_1 = arith.constant 0 : index
    %c0_2 = arith.constant 0 : index
    %1 = vector.load %arg4[%c0_1, %c0_2] : memref<4x1xf32, #tpu.memory_space<vmem>>, vector<4x1xf32>
    %c0_3 = arith.constant 0 : index
    %c0_4 = arith.constant 0 : index
    %2 = vector.load %arg9[%c0_3, %c0_4] : memref<8x1xf32, #tpu.memory_space<vmem>>, vector<8x1xf32>
    %c0_5 = arith.constant 0 : index
    %c0_6 = arith.constant 0 : index
    %3 = vector.load %arg10[%c0_5, %c0_6] : memref<8x1xf32, #tpu.memory_space<vmem>>, vector<8x1xf32>
    %c0_7 = arith.constant 0 : index
    %c0_8 = arith.constant 0 : index
    %4 = vector.load %arg5[%c0_7, %c0_8] : memref<32x32xf32, #tpu.memory_space<vmem>>, vector<32x32xf32>
    %c0_9 = arith.constant 0 : index
    %c0_10 = arith.constant 0 : index
    %5 = vector.load %arg6[%c0_9, %c0_10] : memref<1x32xf32, #tpu.memory_space<vmem>>, vector<1x32xf32>
    %c0_11 = arith.constant 0 : index
    %c0_12 = arith.constant 0 : index
    %6 = vector.load %arg7[%c0_11, %c0_12] : memref<32x32xf32, #tpu.memory_space<vmem>>, vector<32x32xf32>
    %c0_13 = arith.constant 0 : index
    %c0_14 = arith.constant 0 : index
    %7 = vector.load %arg8[%c0_13, %c0_14] : memref<1x32xf32, #tpu.memory_space<vmem>>, vector<1x32xf32>
    %c0_15 = arith.constant 0 : index
    %c0_16 = arith.constant 0 : index
    %c0_17 = arith.constant 0 : index
    %8 = vector.load %arg1[%c0_15, %c0_16, %c0_17] : memref<1x4x32xf32, #tpu.memory_space<vmem>>, vector<1x4x32xf32>
    %9 = vector.shape_cast %8 : vector<1x4x32xf32> to vector<4x32xf32>
    %10 = vector.broadcast %0 : vector<4x1xf32> to vector<4x32xf32>
    %11 = arith.mulf %9, %10 : vector<4x32xf32>
    %12 = vector.broadcast %1 : vector<4x1xf32> to vector<4x32xf32>
    %13 = arith.addf %11, %12 : vector<4x32xf32>
    %cst = arith.constant dense<0.000000e+00> : vector<4x32xf32>
    %14 = tpu.matmul %13, %4, %cst {dimension_numbers = #tpu.dot_dimension_numbers<[1], [0], [0], [1], [0, 0, 1, 1], [], []>} : vector<4x32xf32>, vector<32x32xf32>, vector<4x32xf32> -> vector<4x32xf32>
    %15 = vector.broadcast %5 : vector<1x32xf32> to vector<4x32xf32>
    %16 = arith.addf %14, %15 : vector<4x32xf32>
    %cst_18 = arith.constant 0.000000e+00 : f32
    %17 = vector.broadcast %cst_18 : f32 to vector<4x32xf32>
    %18 = arith.maximumf %16, %17 : vector<4x32xf32>
    %cst_19 = arith.constant dense<0.000000e+00> : vector<4x32xf32>
    %19 = tpu.matmul %18, %6, %cst_19 {dimension_numbers = #tpu.dot_dimension_numbers<[1], [0], [0], [1], [0, 0, 1, 1], [], []>} : vector<4x32xf32>, vector<32x32xf32>, vector<4x32xf32> -> vector<4x32xf32>
    %20 = vector.broadcast %7 : vector<1x32xf32> to vector<4x32xf32>
    %21 = arith.addf %19, %20 : vector<4x32xf32>
    %22 = vector.extract_strided_slice %2 {offsets = [0, 0], sizes = [4, 1], strides = [1, 1]} : vector<8x1xf32> to vector<4x1xf32>
    %23 = vector.broadcast %22 : vector<4x1xf32> to vector<4x32xf32>
    %24 = arith.mulf %21, %23 : vector<4x32xf32>
    %25 = vector.extract_strided_slice %3 {offsets = [0, 0], sizes = [4, 1], strides = [1, 1]} : vector<8x1xf32> to vector<4x1xf32>
    %26 = vector.broadcast %25 : vector<4x1xf32> to vector<4x32xf32>
    %27 = arith.addf %24, %26 : vector<4x32xf32>
    %c0_20 = arith.constant 0 : index
    %c0_21 = arith.constant 0 : index
    %28 = vector.load %arg22[%c0_20, %c0_21] : memref<8x32xf32, #tpu.memory_space<vmem>>, vector<4x32xf32>
    tpu.vector_store %arg22[%c0_20, %c0_21], %27 {strides = array<i32>} : memref<8x32xf32, #tpu.memory_space<vmem>>, vector<4x32xf32>,
    %c0_22 = arith.constant 0 : index
    %c0_23 = arith.constant 0 : index
    %c0_24 = arith.constant 0 : index
    %29 = vector.load %arg2[%c0_22, %c0_23, %c0_24] : memref<1x4x32xf32, #tpu.memory_space<vmem>>, vector<1x4x32xf32>
    %30 = vector.shape_cast %29 : vector<1x4x32xf32> to vector<4x32xf32>
    %31 = vector.extract_strided_slice %2 {offsets = [4, 0], sizes = [4, 1], strides = [1, 1]} : vector<8x1xf32> to vector<4x1xf32>
    %32 = vector.broadcast %31 : vector<4x1xf32> to vector<4x32xf32>
    %33 = arith.mulf %30, %32 : vector<4x32xf32>
    %34 = vector.extract_strided_slice %3 {offsets = [4, 0], sizes = [4, 1], strides = [1, 1]} : vector<8x1xf32> to vector<4x1xf32>
    %35 = vector.broadcast %34 : vector<4x1xf32> to vector<4x32xf32>
    %36 = arith.addf %33, %35 : vector<4x32xf32>
    %c4 = arith.constant 4 : index
    %c0_25 = arith.constant 0 : index
    %37 = vector.load %arg22[%c4, %c0_25] : memref<8x32xf32, #tpu.memory_space<vmem>>, vector<4x32xf32>
    tpu.vector_store %arg22[%c4, %c0_25], %36 {strides = array<i32>} : memref<8x32xf32, #tpu.memory_space<vmem>>, vector<4x32xf32>,
    %c0_26 = arith.constant 0 : index
    %c0_27 = arith.constant 0 : index
    %38 = vector.load %arg22[%c0_26, %c0_27] : memref<8x32xf32, #tpu.memory_space<vmem>>, vector<8x32xf32>
    %c0_28 = arith.constant 0 : index
    %c0_29 = arith.constant 0 : index
    %39 = vector.load %arg11[%c0_28, %c0_29] : memref<32x8xf32, #tpu.memory_space<vmem>>, vector<32x8xf32>
    %cst_30 = arith.constant dense<0.000000e+00> : vector<32x32xf32>
    %40 = tpu.matmul %39, %38, %cst_30 {dimension_numbers = #tpu.dot_dimension_numbers<[1], [0], [0], [1], [0, 0, 1, 1], [], []>} : vector<32x8xf32>, vector<8x32xf32>, vector<32x32xf32> -> vector<32x32xf32>
    %c0_31 = arith.constant 0 : index
    %c0_32 = arith.constant 0 : index
    %41 = vector.load %arg12[%c0_31, %c0_32] : memref<32x1xf32, #tpu.memory_space<vmem>>, vector<32x1xf32>
    %42 = vector.broadcast %41 : vector<32x1xf32> to vector<32x32xf32>
    %43 = arith.addf %40, %42 : vector<32x32xf32>
    %cst_33 = arith.constant 0.000000e+00 : f32
    %44 = vector.broadcast %cst_33 : f32 to vector<32x32xf32>
    %45 = arith.maximumf %43, %44 : vector<32x32xf32>
    %c0_34 = arith.constant 0 : index
    %c0_35 = arith.constant 0 : index
    %46 = vector.load %arg13[%c0_34, %c0_35] : memref<8x32xf32, #tpu.memory_space<vmem>>, vector<8x32xf32>
    %cst_36 = arith.constant dense<0.000000e+00> : vector<8x32xf32>
    %47 = tpu.matmul %46, %45, %cst_36 {dimension_numbers = #tpu.dot_dimension_numbers<[1], [0], [0], [1], [0, 0, 1, 1], [], []>} : vector<8x32xf32>, vector<32x32xf32>, vector<8x32xf32> -> vector<8x32xf32>
    %c0_37 = arith.constant 0 : index
    %c0_38 = arith.constant 0 : index
    %48 = vector.load %arg14[%c0_37, %c0_38] : memref<8x1xf32, #tpu.memory_space<vmem>>, vector<8x1xf32>
    %49 = vector.broadcast %48 : vector<8x1xf32> to vector<8x32xf32>
    %50 = arith.addf %47, %49 : vector<8x32xf32>
    %51 = arith.addf %38, %50 : vector<8x32xf32>
    %c0_39 = arith.constant 0 : index
    %c0_40 = arith.constant 0 : index
    %52 = vector.load %arg15[%c0_39, %c0_40] : memref<8x32xf32, #tpu.memory_space<vmem>>, vector<8x32xf32>
    %c0_41 = arith.constant 0 : index
    %c0_42 = arith.constant 0 : index
    %53 = vector.load %arg16[%c0_41, %c0_42] : memref<8x32xf32, #tpu.memory_space<vmem>>, vector<8x32xf32>
    %54 = vector.shape_cast %51 : vector<8x32xf32> to vector<1x8x32xf32>
    %cst_43 = arith.constant dense<0.000000e+00> : vector<1xf32>
    %55 = vector.multi_reduction <add>, %54, %cst_43 [1, 2] : vector<1x8x32xf32> to vector<1xf32>
    %56 = vector.shape_cast %55 : vector<1xf32> to vector<1x1x1xf32>
    %57 = vector.extract %56[0, 0, 0] : f32 from vector<1x1x1xf32>
    %58 = vector.broadcast %57 : f32 to vector<1x1xf32>
    %cst_44 = arith.constant 2.560000e+02 : f32
    %59 = vector.broadcast %cst_44 : f32 to vector<1x1xf32>
    %60 = arith.divf %58, %59 : vector<1x1xf32>
    %61 = vector.broadcast %60 : vector<1x1xf32> to vector<8x32xf32>
    %62 = arith.subf %51, %61 : vector<8x32xf32>
    %63 = arith.mulf %62, %62 : vector<8x32xf32>
    %64 = vector.shape_cast %63 : vector<8x32xf32> to vector<1x8x32xf32>
    %cst_45 = arith.constant dense<0.000000e+00> : vector<1xf32>
    %65 = vector.multi_reduction <add>, %64, %cst_45 [1, 2] : vector<1x8x32xf32> to vector<1xf32>
    %66 = vector.shape_cast %65 : vector<1xf32> to vector<1x1x1xf32>
    %67 = vector.extract %66[0, 0, 0] : f32 from vector<1x1x1xf32>
    %68 = vector.broadcast %67 : f32 to vector<1x1xf32>
    %cst_46 = arith.constant 2.560000e+02 : f32
    %69 = vector.broadcast %cst_46 : f32 to vector<1x1xf32>
    %70 = arith.divf %68, %69 : vector<1x1xf32>
    %71 = vector.broadcast %60 : vector<1x1xf32> to vector<8x32xf32>
    %72 = arith.subf %51, %71 : vector<8x32xf32>
    %cst_47 = arith.constant 9.99999974E-6 : f32
    %73 = vector.broadcast %cst_47 : f32 to vector<1x1xf32>
    %74 = arith.addf %70, %73 : vector<1x1xf32>
    %75 = math.rsqrt %74 : vector<1x1xf32>
    %76 = vector.broadcast %75 : vector<1x1xf32> to vector<8x32xf32>
    %77 = arith.mulf %72, %76 : vector<8x32xf32>
    %78 = arith.mulf %77, %52 : vector<8x32xf32>
    %79 = arith.addf %78, %53 : vector<8x32xf32>
    %cst_48 = arith.constant 5.000000e-01 : f32
    %80 = vector.broadcast %cst_48 : f32 to vector<8x32xf32>
    %81 = arith.mulf %80, %79 : vector<8x32xf32>
    %cst_49 = arith.constant 4.471500e-02 : f32
    %82 = vector.broadcast %cst_49 : f32 to vector<8x32xf32>
    %83 = arith.mulf %82, %79 : vector<8x32xf32>
    %84 = arith.mulf %83, %79 : vector<8x32xf32>
    %85 = arith.mulf %84, %79 : vector<8x32xf32>
    %86 = arith.addf %79, %85 : vector<8x32xf32>
    %cst_50 = arith.constant 0.797884583 : f32
    %87 = vector.broadcast %cst_50 : f32 to vector<8x32xf32>
    %88 = arith.mulf %87, %86 : vector<8x32xf32>
    %89 = math.tanh %88 : vector<8x32xf32>
    %cst_51 = arith.constant 1.000000e+00 : f32
    %90 = vector.broadcast %cst_51 : f32 to vector<8x32xf32>
    %91 = arith.addf %90, %89 : vector<8x32xf32>
    %92 = arith.mulf %81, %91 : vector<8x32xf32>
    %cst_52 = arith.constant 0.000000e+00 : f32
    %93 = vector.broadcast %cst_52 : f32 to vector<1x32xf32>
    %94 = vector.extract_strided_slice %92 {offsets = [0, 0], sizes = [1, 32], strides = [1, 1]} : vector<8x32xf32> to vector<1x32xf32>
    %c0_53 = arith.constant 0 : index
    %c0_54 = arith.constant 0 : index
    %c0_55 = arith.constant 0 : index
    %95 = vector.load %arg17[%c0_53, %c0_54, %c0_55] : memref<8x32x32xf32, #tpu.memory_space<vmem>>, vector<1x32x32xf32>
    %96 = vector.shape_cast %95 : vector<1x32x32xf32> to vector<32x32xf32>
    %cst_56 = arith.constant dense<0.000000e+00> : vector<1x32xf32>
    %97 = tpu.matmul %94, %96, %cst_56 {dimension_numbers = #tpu.dot_dimension_numbers<[1], [0], [0], [1], [0, 0, 1, 1], [], []>} : vector<1x32xf32>, vector<32x32xf32>, vector<1x32xf32> -> vector<1x32xf32>
    %98 = arith.addf %93, %97 : vector<1x32xf32>
    %99 = vector.extract_strided_slice %92 {offsets = [1, 0], sizes = [1, 32], strides = [1, 1]} : vector<8x32xf32> to vector<1x32xf32>
    %c1 = arith.constant 1 : index
    %c0_57 = arith.constant 0 : index
    %c0_58 = arith.constant 0 : index
    %100 = vector.load %arg17[%c1, %c0_57, %c0_58] : memref<8x32x32xf32, #tpu.memory_space<vmem>>, vector<1x32x32xf32>
    %101 = vector.shape_cast %100 : vector<1x32x32xf32> to vector<32x32xf32>
    %cst_59 = arith.constant dense<0.000000e+00> : vector<1x32xf32>
    %102 = tpu.matmul %99, %101, %cst_59 {dimension_numbers = #tpu.dot_dimension_numbers<[1], [0], [0], [1], [0, 0, 1, 1], [], []>} : vector<1x32xf32>, vector<32x32xf32>, vector<1x32xf32> -> vector<1x32xf32>
    %103 = arith.addf %98, %102 : vector<1x32xf32>
    %104 = vector.extract_strided_slice %92 {offsets = [2, 0], sizes = [1, 32], strides = [1, 1]} : vector<8x32xf32> to vector<1x32xf32>
    %c2 = arith.constant 2 : index
    %c0_60 = arith.constant 0 : index
    %c0_61 = arith.constant 0 : index
    %105 = vector.load %arg17[%c2, %c0_60, %c0_61] : memref<8x32x32xf32, #tpu.memory_space<vmem>>, vector<1x32x32xf32>
    %106 = vector.shape_cast %105 : vector<1x32x32xf32> to vector<32x32xf32>
    %cst_62 = arith.constant dense<0.000000e+00> : vector<1x32xf32>
    %107 = tpu.matmul %104, %106, %cst_62 {dimension_numbers = #tpu.dot_dimension_numbers<[1], [0], [0], [1], [0, 0, 1, 1], [], []>} : vector<1x32xf32>, vector<32x32xf32>, vector<1x32xf32> -> vector<1x32xf32>
    %108 = arith.addf %103, %107 : vector<1x32xf32>
    %109 = vector.extract_strided_slice %92 {offsets = [3, 0], sizes = [1, 32], strides = [1, 1]} : vector<8x32xf32> to vector<1x32xf32>
    %c3 = arith.constant 3 : index
    %c0_63 = arith.constant 0 : index
    %c0_64 = arith.constant 0 : index
    %110 = vector.load %arg17[%c3, %c0_63, %c0_64] : memref<8x32x32xf32, #tpu.memory_space<vmem>>, vector<1x32x32xf32>
    %111 = vector.shape_cast %110 : vector<1x32x32xf32> to vector<32x32xf32>
    %cst_65 = arith.constant dense<0.000000e+00> : vector<1x32xf32>
    %112 = tpu.matmul %109, %111, %cst_65 {dimension_numbers = #tpu.dot_dimension_numbers<[1], [0], [0], [1], [0, 0, 1, 1], [], []>} : vector<1x32xf32>, vector<32x32xf32>, vector<1x32xf32> -> vector<1x32xf32>
    %113 = arith.addf %108, %112 : vector<1x32xf32>
    %114 = vector.extract_strided_slice %92 {offsets = [4, 0], sizes = [1, 32], strides = [1, 1]} : vector<8x32xf32> to vector<1x32xf32>
    %c4_66 = arith.constant 4 : index
    %c0_67 = arith.constant 0 : index
    %c0_68 = arith.constant 0 : index
    %115 = vector.load %arg17[%c4_66, %c0_67, %c0_68] : memref<8x32x32xf32, #tpu.memory_space<vmem>>, vector<1x32x32xf32>
    %116 = vector.shape_cast %115 : vector<1x32x32xf32> to vector<32x32xf32>
    %cst_69 = arith.constant dense<0.000000e+00> : vector<1x32xf32>
    %117 = tpu.matmul %114, %116, %cst_69 {dimension_numbers = #tpu.dot_dimension_numbers<[1], [0], [0], [1], [0, 0, 1, 1], [], []>} : vector<1x32xf32>, vector<32x32xf32>, vector<1x32xf32> -> vector<1x32xf32>
    %118 = arith.addf %113, %117 : vector<1x32xf32>
    %119 = vector.extract_strided_slice %92 {offsets = [5, 0], sizes = [1, 32], strides = [1, 1]} : vector<8x32xf32> to vector<1x32xf32>
    %c5 = arith.constant 5 : index
    %c0_70 = arith.constant 0 : index
    %c0_71 = arith.constant 0 : index
    %120 = vector.load %arg17[%c5, %c0_70, %c0_71] : memref<8x32x32xf32, #tpu.memory_space<vmem>>, vector<1x32x32xf32>
    %121 = vector.shape_cast %120 : vector<1x32x32xf32> to vector<32x32xf32>
    %cst_72 = arith.constant dense<0.000000e+00> : vector<1x32xf32>
    %122 = tpu.matmul %119, %121, %cst_72 {dimension_numbers = #tpu.dot_dimension_numbers<[1], [0], [0], [1], [0, 0, 1, 1], [], []>} : vector<1x32xf32>, vector<32x32xf32>, vector<1x32xf32> -> vector<1x32xf32>
    %123 = arith.addf %118, %122 : vector<1x32xf32>
    %124 = vector.extract_strided_slice %92 {offsets = [6, 0], sizes = [1, 32], strides = [1, 1]} : vector<8x32xf32> to vector<1x32xf32>
    %c6 = arith.constant 6 : index
    %c0_73 = arith.constant 0 : index
    %c0_74 = arith.constant 0 : index
    %125 = vector.load %arg17[%c6, %c0_73, %c0_74] : memref<8x32x32xf32, #tpu.memory_space<vmem>>, vector<1x32x32xf32>
    %126 = vector.shape_cast %125 : vector<1x32x32xf32> to vector<32x32xf32>
    %cst_75 = arith.constant dense<0.000000e+00> : vector<1x32xf32>
    %127 = tpu.matmul %124, %126, %cst_75 {dimension_numbers = #tpu.dot_dimension_numbers<[1], [0], [0], [1], [0, 0, 1, 1], [], []>} : vector<1x32xf32>, vector<32x32xf32>, vector<1x32xf32> -> vector<1x32xf32>
    %128 = arith.addf %123, %127 : vector<1x32xf32>
    %129 = vector.extract_strided_slice %92 {offsets = [7, 0], sizes = [1, 32], strides = [1, 1]} : vector<8x32xf32> to vector<1x32xf32>
    %c7 = arith.constant 7 : index
    %c0_76 = arith.constant 0 : index
    %c0_77 = arith.constant 0 : index
    %130 = vector.load %arg17[%c7, %c0_76, %c0_77] : memref<8x32x32xf32, #tpu.memory_space<vmem>>, vector<1x32x32xf32>
    %131 = vector.shape_cast %130 : vector<1x32x32xf32> to vector<32x32xf32>
    %cst_78 = arith.constant dense<0.000000e+00> : vector<1x32xf32>
    %132 = tpu.matmul %129, %131, %cst_78 {dimension_numbers = #tpu.dot_dimension_numbers<[1], [0], [0], [1], [0, 0, 1, 1], [], []>} : vector<1x32xf32>, vector<32x32xf32>, vector<1x32xf32> -> vector<1x32xf32>
    %133 = arith.addf %128, %132 : vector<1x32xf32>
    %c0_79 = arith.constant 0 : index
    %c0_80 = arith.constant 0 : index
    %134 = vector.load %arg18[%c0_79, %c0_80] : memref<1x32xf32, #tpu.memory_space<vmem>>, vector<1x32xf32>
    %135 = arith.addf %133, %134 : vector<1x32xf32>
    %cst_81 = arith.constant 5.000000e-01 : f32
    %136 = vector.broadcast %cst_81 : f32 to vector<1x32xf32>
    %137 = arith.mulf %136, %135 : vector<1x32xf32>
    %cst_82 = arith.constant 4.471500e-02 : f32
    %138 = vector.broadcast %cst_82 : f32 to vector<1x32xf32>
    %139 = arith.mulf %138, %135 : vector<1x32xf32>
    %140 = arith.mulf %139, %135 : vector<1x32xf32>
    %141 = arith.mulf %140, %135 : vector<1x32xf32>
    %142 = arith.addf %135, %141 : vector<1x32xf32>
    %cst_83 = arith.constant 0.797884583 : f32
    %143 = vector.broadcast %cst_83 : f32 to vector<1x32xf32>
    %144 = arith.mulf %143, %142 : vector<1x32xf32>
    %145 = math.tanh %144 : vector<1x32xf32>
    %cst_84 = arith.constant 1.000000e+00 : f32
    %146 = vector.broadcast %cst_84 : f32 to vector<1x32xf32>
    %147 = arith.addf %146, %145 : vector<1x32xf32>
    %148 = arith.mulf %137, %147 : vector<1x32xf32>
    %c0_85 = arith.constant 0 : index
    %c0_86 = arith.constant 0 : index
    %149 = vector.load %arg19[%c0_85, %c0_86] : memref<32x128xf32, #tpu.memory_space<vmem>>, vector<32x128xf32>
    %cst_87 = arith.constant dense<0.000000e+00> : vector<1x128xf32>
    %150 = tpu.matmul %148, %149, %cst_87 {dimension_numbers = #tpu.dot_dimension_numbers<[1], [0], [0], [1], [0, 0, 1, 1], [], []>} : vector<1x32xf32>, vector<32x128xf32>, vector<1x128xf32> -> vector<1x128xf32>
    %c0_88 = arith.constant 0 : index
    %c0_89 = arith.constant 0 : index
    %151 = vector.load %arg20[%c0_88, %c0_89] : memref<1x128xf32, #tpu.memory_space<vmem>>, vector<1x128xf32>
    %152 = arith.addf %150, %151 : vector<1x128xf32>
    %c0_90 = arith.constant 0 : index
    %c0_91 = arith.constant 0 : index
    %c0_92 = arith.constant 0 : index
    %153 = vector.load %arg21[%c0_90, %c0_91, %c0_92] : memref<1x1x128xf32, #tpu.memory_space<vmem>>, vector<1x1x128xf32>
    %154 = vector.shape_cast %153 : vector<1x1x128xf32> to vector<1x128xf32>
    %155 = vector.shape_cast %152 : vector<1x128xf32> to vector<1x1x128xf32>
    tpu.vector_store %arg21[%c0_90, %c0_91, %c0_92], %155 {strides = array<i32>} : memref<1x1x128xf32, #tpu.memory_space<vmem>>, vector<1x1x128xf32>,
    return
  }
  func.func @transform_0(%arg0: i32) -> (i32, i32, i32) {
    %c0_i32 = arith.constant 0 : i32
    %c0_i32_0 = arith.constant 0 : i32
    %c0_i32_1 = arith.constant 0 : i32
    return %arg0, %c0_i32, %c0_i32_0 : i32, i32, i32
  }
  func.func @transform_1(%arg0: i32) -> (i32, i32, i32) {
    %c0_i32 = arith.constant 0 : i32
    %c0_i32_0 = arith.constant 0 : i32
    %c0_i32_1 = arith.constant 0 : i32
    return %arg0, %c0_i32, %c0_i32_0 : i32, i32, i32
  }
  func.func @transform_2(%arg0: i32) -> (i32, i32) {
    %c0_i32 = arith.constant 0 : i32
    %c0_i32_0 = arith.constant 0 : i32
    %c0_i32_1 = arith.constant 0 : i32
    return %c0_i32, %c0_i32_0 : i32, i32
  }
  func.func @transform_3(%arg0: i32) -> (i32, i32) {
    %c0_i32 = arith.constant 0 : i32
    %c0_i32_0 = arith.constant 0 : i32
    %c0_i32_1 = arith.constant 0 : i32
    return %c0_i32, %c0_i32_0 : i32, i32
  }
  func.func @transform_4(%arg0: i32) -> (i32, i32) {
    %c0_i32 = arith.constant 0 : i32
    %c0_i32_0 = arith.constant 0 : i32
    %c0_i32_1 = arith.constant 0 : i32
    return %c0_i32, %c0_i32_0 : i32, i32
  }
  func.func @transform_5(%arg0: i32) -> (i32, i32) {
    %c0_i32 = arith.constant 0 : i32
    %c0_i32_0 = arith.constant 0 : i32
    %c0_i32_1 = arith.constant 0 : i32
    return %c0_i32, %c0_i32_0 : i32, i32
  }
  func.func @transform_6(%arg0: i32) -> (i32, i32) {
    %c0_i32 = arith.constant 0 : i32
    %c0_i32_0 = arith.constant 0 : i32
    %c0_i32_1 = arith.constant 0 : i32
    return %c0_i32, %c0_i32_0 : i32, i32
  }
  func.func @transform_7(%arg0: i32) -> (i32, i32) {
    %c0_i32 = arith.constant 0 : i32
    %c0_i32_0 = arith.constant 0 : i32
    %c0_i32_1 = arith.constant 0 : i32
    return %c0_i32, %c0_i32_0 : i32, i32
  }
  func.func @transform_8(%arg0: i32) -> (i32, i32) {
    %c0_i32 = arith.constant 0 : i32
    %c0_i32_0 = arith.constant 0 : i32
    %c0_i32_1 = arith.constant 0 : i32
    return %c0_i32, %c0_i32_0 : i32, i32
  }
  func.func @transform_9(%arg0: i32) -> (i32, i32) {
    %c0_i32 = arith.constant 0 : i32
    %c0_i32_0 = arith.constant 0 : i32
    %c0_i32_1 = arith.constant 0 : i32
    return %c0_i32, %c0_i32_0 : i32, i32
  }
  func.func @transform_10(%arg0: i32) -> (i32, i32) {
    %c0_i32 = arith.constant 0 : i32
    %c0_i32_0 = arith.constant 0 : i32
    %c0_i32_1 = arith.constant 0 : i32
    return %c0_i32, %c0_i32_0 : i32, i32
  }
  func.func @transform_11(%arg0: i32) -> (i32, i32) {
    %c0_i32 = arith.constant 0 : i32
    %c0_i32_0 = arith.constant 0 : i32
    %c0_i32_1 = arith.constant 0 : i32
    return %c0_i32, %c0_i32_0 : i32, i32
  }
  func.func @transform_12(%arg0: i32) -> (i32, i32) {
    %c0_i32 = arith.constant 0 : i32
    %c0_i32_0 = arith.constant 0 : i32
    %c0_i32_1 = arith.constant 0 : i32
    return %c0_i32, %c0_i32_0 : i32, i32
  }
  func.func @transform_13(%arg0: i32) -> (i32, i32) {
    %c0_i32 = arith.constant 0 : i32
    %c0_i32_0 = arith.constant 0 : i32
    %c0_i32_1 = arith.constant 0 : i32
    return %c0_i32, %c0_i32_0 : i32, i32
  }
  func.func @transform_14(%arg0: i32) -> (i32, i32) {
    %c0_i32 = arith.constant 0 : i32
    %c0_i32_0 = arith.constant 0 : i32
    %c0_i32_1 = arith.constant 0 : i32
    return %c0_i32, %c0_i32_0 : i32, i32
  }
  func.func @transform_15(%arg0: i32) -> (i32, i32) {
    %c0_i32 = arith.constant 0 : i32
    %c0_i32_0 = arith.constant 0 : i32
    %c0_i32_1 = arith.constant 0 : i32
    return %c0_i32, %c0_i32_0 : i32, i32
  }
  func.func @transform_16(%arg0: i32) -> (i32, i32, i32) {
    %c0_i32 = arith.constant 0 : i32
    %c0_i32_0 = arith.constant 0 : i32
    %c0_i32_1 = arith.constant 0 : i32
    %c0_i32_2 = arith.constant 0 : i32
    return %c0_i32, %c0_i32_0, %c0_i32_1 : i32, i32, i32
  }
  func.func @transform_17(%arg0: i32) -> (i32, i32) {
    %c0_i32 = arith.constant 0 : i32
    %c0_i32_0 = arith.constant 0 : i32
    %c0_i32_1 = arith.constant 0 : i32
    return %c0_i32, %c0_i32_0 : i32, i32
  }
  func.func @transform_18(%arg0: i32) -> (i32, i32) {
    %c0_i32 = arith.constant 0 : i32
    %c0_i32_0 = arith.constant 0 : i32
    %c0_i32_1 = arith.constant 0 : i32
    return %c0_i32, %c0_i32_0 : i32, i32
  }
  func.func @transform_19(%arg0: i32) -> (i32, i32) {
    %c0_i32 = arith.constant 0 : i32
    %c0_i32_0 = arith.constant 0 : i32
    %c0_i32_1 = arith.constant 0 : i32
    return %c0_i32, %c0_i32_0 : i32, i32
  }
  func.func @transform_20(%arg0: i32) -> (i32, i32, i32) {
    %c0_i32 = arith.constant 0 : i32
    %c0_i32_0 = arith.constant 0 : i32
    %c0_i32_1 = arith.constant 0 : i32
    return %arg0, %c0_i32, %c0_i32_0 : i32, i32, i32
  }
}

</mosaic_0001>

<llo_original>
// kernel: tpu_custom_call.1
$region0: #{tpu_custom_call.1}
  #allocation0 [shape = 'u32[]', space=smem, size = 0x4, offset = 0x4, fixed_abs, tag = 'smem constant byte address 0x4 - core index']
  #allocation1 [shape = 'u32[144,128]{1,0:T(1,128)}', space=vmem, size = 0x12000, scoped, tag = 'internal scratch']
  #allocation2 [shape = 'f32[8,32]{1,0:T(8,128)}', space=vmem, size = 0x1000, scoped, tag = 'scratch operand']
  %s0 = inlined_call_operand.hbm [shape: f32[2,4,32], index: 0, kind: input, shape index: {}]
  %s1 = inlined_call_operand.hbm [shape: f32[2,4,32], index: 1, kind: input, shape index: {}]
  %s2 = inlined_call_operand.vmem [shape: f32[4,1], index: 2, kind: input, shape index: {}]
  %s3 = inlined_call_operand.vmem [shape: f32[4,1], index: 3, kind: input, shape index: {}]
  %s4 = inlined_call_operand.vmem [shape: f32[32,32], index: 4, kind: input, shape index: {}]
  %s5 = inlined_call_operand.hbm [shape: f32[1,32], index: 5, kind: input, shape index: {}]
  %s6 = inlined_call_operand.vmem [shape: f32[32,32], index: 6, kind: input, shape index: {}]
  %s7 = inlined_call_operand.hbm [shape: f32[1,32], index: 7, kind: input, shape index: {}]
  %s8 = inlined_call_operand.vmem [shape: f32[8,1], index: 8, kind: input, shape index: {}]
  %s9 = inlined_call_operand.vmem [shape: f32[8,1], index: 9, kind: input, shape index: {}]
  %s10 = inlined_call_operand.vmem [shape: f32[32,8], index: 10, kind: input, shape index: {}]
  %s11 = inlined_call_operand.vmem [shape: f32[32,1], index: 11, kind: input, shape index: {}]
  %s12 = inlined_call_operand.vmem [shape: f32[8,32], index: 12, kind: input, shape index: {}]
  %s13 = inlined_call_operand.vmem [shape: f32[8,1], index: 13, kind: input, shape index: {}]
  %s14 = inlined_call_operand.vmem [shape: f32[8,32], index: 14, kind: input, shape index: {}]
  %s15 = inlined_call_operand.vmem [shape: f32[8,32], index: 15, kind: input, shape index: {}]
  %s16 = inlined_call_operand.hbm [shape: f32[8,32,32], index: 16, kind: input, shape index: {}]
  %s17 = inlined_call_operand.vmem [shape: f32[1,32], index: 17, kind: input, shape index: {}]
  %s18 = inlined_call_operand.vmem [shape: f32[32,128], index: 18, kind: input, shape index: {}]
  %s19 = inlined_call_operand.vmem [shape: f32[1,128], index: 19, kind: input, shape index: {}]
  %s20 = inlined_call_operand.hbm [shape: f32[2,1,128], index: 20, kind: output, shape index: {}]
  %s21 = sld [smem:[#allocation0]]
  $region133: #{tpu_custom_call.1} parent=0
    _
  %s23 = ssub.s32 1, %s21
  %s24 = scalar_select 0, %s23, %s21
  $region1: #{tpu_custom_call.1} parent=0
    #allocation3 [shape = 'u8[4096]{0}', space=vmem, size = 0x1000, scoped, tag = 'input window, operand 0']
    #allocation4 [shape = 's32[2]{0}', space=sflag, size = 0x8, scoped, tag = 'scoped memory for tpu_custom_call.1']
    #allocation5 [shape = 's32[2]{0}', space=sflag, size = 0x8, scoped, tag = 'scoped memory for tpu_custom_call.1']
    #allocation6 [shape = 'u8[4096]{0}', space=vmem, size = 0x1000, scoped, tag = 'input window, operand 1']
    #allocation7 [shape = 's32[2]{0}', space=sflag, size = 0x8, scoped, tag = 'scoped memory for tpu_custom_call.1']
    #allocation8 [shape = 'u8[512]{0}', space=vmem, size = 0x400, scoped, tag = 'input window, operand 5, single buffered']
    #allocation9 [shape = 'u8[512]{0}', space=vmem, size = 0x400, scoped, tag = 'input window, operand 7, single buffered']
    #allocation10 [shape = 's32[1]{0}', space=sflag, size = 0x4, scoped, tag = 'scoped memory for tpu_custom_call.1']
    #allocation11 [shape = 'u8[131072]{0}', space=vmem, size = 0x20000, scoped, tag = 'input window, operand 16, single buffered']
    #allocation12 [shape = 'u8[1024]{0}', space=vmem, size = 0x400, scoped, tag = 'output window, operand 0']
    %25 = vsyncpa [#allocation4], 0
    %s26 = scalar_lea.sflag [#allocation4], 1
    %27 = vsyncpa %s26, 0
    %28 = vsyncpa [#allocation7], 0
    %s29 = scalar_lea.sflag [#allocation7], 1
    %30 = vsyncpa %s29, 0
    %31 = vsyncpa [#allocation10], 0
    %32 = vsyncpa [#allocation5], 0
    %s33 = scalar_lea.sflag [#allocation5], 1
    %34 = vsyncpa %s33, 0
    loop: start=0, step=1, limit=4
    $region2: #{tpu_custom_call.1} parent=1 // loop_pre_header
      _
    $region3: #{tpu_custom_call.1} parent=1 // loop_header
      %s36 = sphi 0, %s40
      %p37 = scmp.ge.s32.totalorder %s36, 4
      %s46 = sphi 0, %s48
      %s49 = sphi 0, %s46
      %s50 = sphi 0, %s49
      %s66 = sphi 0, %s50
      %s72 = sphi 0, %s74
      %s75 = sphi 0, %s72
      %s76 = sphi 0, %s75
      %s92 = sphi 0, %s76
      %s96 = sphi 0, %s96
      %s98 = sphi 0, %s96
      %s99 = sphi 0, %s98
      %s113 = sphi 0, %s99
      %s117 = sphi 0, %s117
      %s119 = sphi 0, %s117
      %s120 = sphi 0, %s119
      %s134 = sphi 0, %s120
      %s138 = sphi 0, %s138
      %s140 = sphi 0, %s138
      %s141 = sphi 0, %s140
      %s155 = sphi 0, %s141
      %s159 = sphi 0, %s159
      %s161 = sphi 0, %s159
      %s162 = sphi 0, %s161
      %s176 = sphi 0, %s162
      %s180 = sphi 0, %s180
      %s182 = sphi 0, %s180
      %s183 = sphi 0, %s182
      %s197 = sphi 0, %s183
      %s201 = sphi 0, %s201
      %s203 = sphi 0, %s201
      %s204 = sphi 0, %s203
      %s218 = sphi 0, %s204
      %s222 = sphi 0, %s222
      %s224 = sphi 0, %s222
      %s225 = sphi 0, %s224
      %s239 = sphi 0, %s225
      %s243 = sphi 0, %s243
      %s245 = sphi 0, %s243
      %s246 = sphi 0, %s245
      %s260 = sphi 0, %s246
      %s264 = sphi 0, %s264
      %s266 = sphi 0, %s264
      %s267 = sphi 0, %s266
      %s281 = sphi 0, %s267
      %s285 = sphi 0, %s285
      %s287 = sphi 0, %s285
      %s288 = sphi 0, %s287
      %s302 = sphi 0, %s288
      %s306 = sphi 0, %s306
      %s308 = sphi 0, %s306
      %s309 = sphi 0, %s308
      %s323 = sphi 0, %s309
      %s327 = sphi 0, %s327
      %s329 = sphi 0, %s327
      %s330 = sphi 0, %s329
      %s344 = sphi 0, %s330
      %s348 = sphi 0, %s348
      %s350 = sphi 0, %s348
      %s351 = sphi 0, %s350
      %s365 = sphi 0, %s351
      %s369 = sphi 0, %s369
      %s371 = sphi 0, %s369
      %s372 = sphi 0, %s371
      %s386 = sphi 0, %s372
      %s390 = sphi 0, %s390
      %s392 = sphi 0, %s390
      %s393 = sphi 0, %s392
      %s407 = sphi 0, %s393
      %s411 = sphi 0, %s411
      %s413 = sphi 0, %s411
      %s414 = sphi 0, %s413
      %s428 = sphi 0, %s414
      %s432 = sphi 0, %s432
      %s434 = sphi 0, %s432
      %s435 = sphi 0, %s434
      %s449 = sphi 0, %s435
      %s453 = sphi 0, %s453
      %s455 = sphi 0, %s453
      %s456 = sphi 0, %s455
      %s470 = sphi 0, %s456
      %s476 = sphi 0, %s478
      %s479 = sphi 0, %s476
      %s480 = sphi 0, %s479
      %s496 = sphi 0, %s480
    $region4: #{tpu_custom_call.1} parent=1 // loop_header_branch
      %39 = sbr.rel (%p37) target = $region8
    $region5: #{tpu_custom_call.1} parent=1 // loop_body
      %s41 = ssub.s32 %s36, 1
      %s42 = ssub.s32 %s36, 2
      %s43 = sadd.s32 %s36, 1
      %s44 = ssub.s32 %s36, %s43
      %p45 = scmp.eq.s32.totalorder %s44, 0
      %s47 = sadd.s32 %s46, 1
      %s48 = scalar_select %p45, %s46, %s47
      %p51 = pneg %p45
      %p52 = scmp.eq.s32.totalorder %s36, 1
      %p53 = por %p51, %p52
      %p54 = scmp.ne.s32.totalorder %s46, %s49
      %p55 = scmp.eq.s32.totalorder %s36, 0
      %p56 = por %p54, %p55
      %p57 = scmp.ne.s32.totalorder %s46, %s49
      %p58 = scmp.eq.s32.totalorder %s41, 1
      %p59 = por %p57, %p58
      %p60 = scmp.ne.s32.totalorder %s49, %s50
      %p61 = scmp.eq.s32.totalorder %s41, 0
      %p62 = por %p60, %p61
      %p63 = scmp.ne.s32.totalorder %s49, %s50
      %p64 = scmp.eq.s32.totalorder %s42, 1
      %p65 = por %p63, %p64
      %p67 = scmp.ne.s32.totalorder %s50, %s66
      %p68 = scmp.eq.s32.totalorder %s42, 0
      %p69 = por %p67, %p68
      %s70 = ssub.s32 %s36, %s43
      %p71 = scmp.eq.s32.totalorder %s70, 0
      %s73 = sadd.s32 %s72, 1
      %s74 = scalar_select %p71, %s72, %s73
      %p77 = pneg %p71
      %p78 = scmp.eq.s32.totalorder %s36, 1
      %p79 = por %p77, %p78
      %p80 = scmp.ne.s32.totalorder %s72, %s75
      %p81 = scmp.eq.s32.totalorder %s36, 0
      %p82 = por %p80, %p81
      %p83 = scmp.ne.s32.totalorder %s72, %s75
      %p84 = scmp.eq.s32.totalorder %s41, 1
      %p85 = por %p83, %p84
      %p86 = scmp.ne.s32.totalorder %s75, %s76
      %p87 = scmp.eq.s32.totalorder %s41, 0
      %p88 = por %p86, %p87
      %p89 = scmp.ne.s32.totalorder %s75, %s76
      %p90 = scmp.eq.s32.totalorder %s42, 1
      %p91 = por %p89, %p90
      %p93 = scmp.ne.s32.totalorder %s76, %s92
      %p94 = scmp.eq.s32.totalorder %s42, 0
      %p95 = por %p93, %p94
      %s97 = sadd.s32 %s96, 1
      %p100 = scmp.eq.s32.totalorder %s36, 1
      %p101 = scmp.ne.s32.totalorder %s96, %s98
      %p102 = scmp.eq.s32.totalorder %s36, 0
      %p103 = por %p101, %p102
      %p104 = scmp.ne.s32.totalorder %s96, %s98
      %p105 = scmp.eq.s32.totalorder %s41, 1
      %p106 = por %p104, %p105
      %p107 = scmp.ne.s32.totalorder %s98, %s99
      %p108 = scmp.eq.s32.totalorder %s41, 0
      %p109 = por %p107, %p108
      %p110 = scmp.ne.s32.totalorder %s98, %s99
      %p111 = scmp.eq.s32.totalorder %s42, 1
      %p112 = por %p110, %p111
      %p114 = scmp.ne.s32.totalorder %s99, %s113
      %p115 = scmp.eq.s32.totalorder %s42, 0
      %p116 = por %p114, %p115
      %s118 = sadd.s32 %s117, 1
      %p121 = scmp.eq.s32.totalorder %s36, 1
      %p122 = scmp.ne.s32.totalorder %s117, %s119
      %p123 = scmp.eq.s32.totalorder %s36, 0
      %p124 = por %p122, %p123
      %p125 = scmp.ne.s32.totalorder %s117, %s119
      %p126 = scmp.eq.s32.totalorder %s41, 1
      %p127 = por %p125, %p126
      %p128 = scmp.ne.s32.totalorder %s119, %s120
      %p129 = scmp.eq.s32.totalorder %s41, 0
      %p130 = por %p128, %p129
      %p131 = scmp.ne.s32.totalorder %s119, %s120
      %p132 = scmp.eq.s32.totalorder %s42, 1
      %p133 = por %p131, %p132
      %p135 = scmp.ne.s32.totalorder %s120, %s134
      %p136 = scmp.eq.s32.totalorder %s42, 0
      %p137 = por %p135, %p136
      %s139 = sadd.s32 %s138, 1
      %p142 = scmp.eq.s32.totalorder %s36, 1
      %p143 = scmp.ne.s32.totalorder %s138, %s140
      %p144 = scmp.eq.s32.totalorder %s36, 0
      %p145 = por %p143, %p144
      %p146 = scmp.ne.s32.totalorder %s138, %s140
      %p147 = scmp.eq.s32.totalorder %s41, 1
      %p148 = por %p146, %p147
      %p149 = scmp.ne.s32.totalorder %s140, %s141
      %p150 = scmp.eq.s32.totalorder %s41, 0
      %p151 = por %p149, %p150
      %p152 = scmp.ne.s32.totalorder %s140, %s141
      %p153 = scmp.eq.s32.totalorder %s42, 1
      %p154 = por %p152, %p153
      %p156 = scmp.ne.s32.totalorder %s141, %s155
      %p157 = scmp.eq.s32.totalorder %s42, 0
      %p158 = por %p156, %p157
      %s160 = sadd.s32 %s159, 1
      %p163 = scmp.eq.s32.totalorder %s36, 1
      %p164 = scmp.ne.s32.totalorder %s159, %s161
      %p165 = scmp.eq.s32.totalorder %s36, 0
      %p166 = por %p164, %p165
      %p167 = scmp.ne.s32.totalorder %s159, %s161
      %p168 = scmp.eq.s32.totalorder %s41, 1
      %p169 = por %p167, %p168
      %p170 = scmp.ne.s32.totalorder %s161, %s162
      %p171 = scmp.eq.s32.totalorder %s41, 0
      %p172 = por %p170, %p171
      %p173 = scmp.ne.s32.totalorder %s161, %s162
      %p174 = scmp.eq.s32.totalorder %s42, 1
      %p175 = por %p173, %p174
      %p177 = scmp.ne.s32.totalorder %s162, %s176
      %p178 = scmp.eq.s32.totalorder %s42, 0
      %p179 = por %p177, %p178
      %s181 = sadd.s32 %s180, 1
      %p184 = scmp.eq.s32.totalorder %s36, 1
      %p185 = scmp.ne.s32.totalorder %s180, %s182
      %p186 = scmp.eq.s32.totalorder %s36, 0
      %p187 = por %p185, %p186
      %p188 = scmp.ne.s32.totalorder %s180, %s182
      %p189 = scmp.eq.s32.totalorder %s41, 1
      %p190 = por %p188, %p189
      %p191 = scmp.ne.s32.totalorder %s182, %s183
      %p192 = scmp.eq.s32.totalorder %s41, 0
      %p193 = por %p191, %p192
      %p194 = scmp.ne.s32.totalorder %s182, %s183
      %p195 = scmp.eq.s32.totalorder %s42, 1
      %p196 = por %p194, %p195
      %p198 = scmp.ne.s32.totalorder %s183, %s197
      %p199 = scmp.eq.s32.totalorder %s42, 0
      %p200 = por %p198, %p199
      %s202 = sadd.s32 %s201, 1
      %p205 = scmp.eq.s32.totalorder %s36, 1
      %p206 = scmp.ne.s32.totalorder %s201, %s203
      %p207 = scmp.eq.s32.totalorder %s36, 0
      %p208 = por %p206, %p207
      %p209 = scmp.ne.s32.totalorder %s201, %s203
      %p210 = scmp.eq.s32.totalorder %s41, 1
      %p211 = por %p209, %p210
      %p212 = scmp.ne.s32.totalorder %s203, %s204
      %p213 = scmp.eq.s32.totalorder %s41, 0
      %p214 = por %p212, %p213
      %p215 = scmp.ne.s32.totalorder %s203, %s204
      %p216 = scmp.eq.s32.totalorder %s42, 1
      %p217 = por %p215, %p216
      %p219 = scmp.ne.s32.totalorder %s204, %s218
      %p220 = scmp.eq.s32.totalorder %s42, 0
      %p221 = por %p219, %p220
      %s223 = sadd.s32 %s222, 1
      %p226 = scmp.eq.s32.totalorder %s36, 1
      %p227 = scmp.ne.s32.totalorder %s222, %s224
      %p228 = scmp.eq.s32.totalorder %s36, 0
      %p229 = por %p227, %p228
      %p230 = scmp.ne.s32.totalorder %s222, %s224
      %p231 = scmp.eq.s32.totalorder %s41, 1
      %p232 = por %p230, %p231
      %p233 = scmp.ne.s32.totalorder %s224, %s225
      %p234 = scmp.eq.s32.totalorder %s41, 0
      %p235 = por %p233, %p234
      %p236 = scmp.ne.s32.totalorder %s224, %s225
      %p237 = scmp.eq.s32.totalorder %s42, 1
      %p238 = por %p236, %p237
      %p240 = scmp.ne.s32.totalorder %s225, %s239
      %p241 = scmp.eq.s32.totalorder %s42, 0
      %p242 = por %p240, %p241
      %s244 = sadd.s32 %s243, 1
      %p247 = scmp.eq.s32.totalorder %s36, 1
      %p248 = scmp.ne.s32.totalorder %s243, %s245
      %p249 = scmp.eq.s32.totalorder %s36, 0
      %p250 = por %p248, %p249
      %p251 = scmp.ne.s32.totalorder %s243, %s245
      %p252 = scmp.eq.s32.totalorder %s41, 1
      %p253 = por %p251, %p252
      %p254 = scmp.ne.s32.totalorder %s245, %s246
      %p255 = scmp.eq.s32.totalorder %s41, 0
      %p256 = por %p254, %p255
      %p257 = scmp.ne.s32.totalorder %s245, %s246
      %p258 = scmp.eq.s32.totalorder %s42, 1
      %p259 = por %p257, %p258
      %p261 = scmp.ne.s32.totalorder %s246, %s260
      %p262 = scmp.eq.s32.totalorder %s42, 0
      %p263 = por %p261, %p262
      %s265 = sadd.s32 %s264, 1
      %p268 = scmp.eq.s32.totalorder %s36, 1
      %p269 = scmp.ne.s32.totalorder %s264, %s266
      %p270 = scmp.eq.s32.totalorder %s36, 0
      %p271 = por %p269, %p270
      %p272 = scmp.ne.s32.totalorder %s264, %s266
      %p273 = scmp.eq.s32.totalorder %s41, 1
      %p274 = por %p272, %p273
      %p275 = scmp.ne.s32.totalorder %s266, %s267
      %p276 = scmp.eq.s32.totalorder %s41, 0
      %p277 = por %p275, %p276
      %p278 = scmp.ne.s32.totalorder %s266, %s267
      %p279 = scmp.eq.s32.totalorder %s42, 1
      %p280 = por %p278, %p279
      %p282 = scmp.ne.s32.totalorder %s267, %s281
      %p283 = scmp.eq.s32.totalorder %s42, 0
      %p284 = por %p282, %p283
      %s286 = sadd.s32 %s285, 1
      %p289 = scmp.eq.s32.totalorder %s36, 1
      %p290 = scmp.ne.s32.totalorder %s285, %s287
      %p291 = scmp.eq.s32.totalorder %s36, 0
      %p292 = por %p290, %p291
      %p293 = scmp.ne.s32.totalorder %s285, %s287
      %p294 = scmp.eq.s32.totalorder %s41, 1
      %p295 = por %p293, %p294
      %p296 = scmp.ne.s32.totalorder %s287, %s288
      %p297 = scmp.eq.s32.totalorder %s41, 0
      %p298 = por %p296, %p297
      %p299 = scmp.ne.s32.totalorder %s287, %s288
      %p300 = scmp.eq.s32.totalorder %s42, 1
      %p301 = por %p299, %p300
      %p303 = scmp.ne.s32.totalorder %s288, %s302
      %p304 = scmp.eq.s32.totalorder %s42, 0
      %p305 = por %p303, %p304
      %s307 = sadd.s32 %s306, 1
      %p310 = scmp.eq.s32.totalorder %s36, 1
      %p311 = scmp.ne.s32.totalorder %s306, %s308
      %p312 = scmp.eq.s32.totalorder %s36, 0
      %p313 = por %p311, %p312
      %p314 = scmp.ne.s32.totalorder %s306, %s308
      %p315 = scmp.eq.s32.totalorder %s41, 1
      %p316 = por %p314, %p315
      %p317 = scmp.ne.s32.totalorder %s308, %s309
      %p318 = scmp.eq.s32.totalorder %s41, 0
      %p319 = por %p317, %p318
      %p320 = scmp.ne.s32.totalorder %s308, %s309
      %p321 = scmp.eq.s32.totalorder %s42, 1
      %p322 = por %p320, %p321
      %p324 = scmp.ne.s32.totalorder %s309, %s323
      %p325 = scmp.eq.s32.totalorder %s42, 0
      %p326 = por %p324, %p325
      %s328 = sadd.s32 %s327, 1
      %p331 = scmp.eq.s32.totalorder %s36, 1
      %p332 = scmp.ne.s32.totalorder %s327, %s329
      %p333 = scmp.eq.s32.totalorder %s36, 0
      %p334 = por %p332, %p333
      %p335 = scmp.ne.s32.totalorder %s327, %s329
      %p336 = scmp.eq.s32.totalorder %s41, 1
      %p337 = por %p335, %p336
      %p338 = scmp.ne.s32.totalorder %s329, %s330
      %p339 = scmp.eq.s32.totalorder %s41, 0
      %p340 = por %p338, %p339
      %p341 = scmp.ne.s32.totalorder %s329, %s330
      %p342 = scmp.eq.s32.totalorder %s42, 1
      %p343 = por %p341, %p342
      %p345 = scmp.ne.s32.totalorder %s330, %s344
      %p346 = scmp.eq.s32.totalorder %s42, 0
      %p347 = por %p345, %p346
      %s349 = sadd.s32 %s348, 1
      %p352 = scmp.eq.s32.totalorder %s36, 1
      %p353 = scmp.ne.s32.totalorder %s348, %s350
      %p354 = scmp.eq.s32.totalorder %s36, 0
      %p355 = por %p353, %p354
      %p356 = scmp.ne.s32.totalorder %s348, %s350
      %p357 = scmp.eq.s32.totalorder %s41, 1
      %p358 = por %p356, %p357
      %p359 = scmp.ne.s32.totalorder %s350, %s351
      %p360 = scmp.eq.s32.totalorder %s41, 0
      %p361 = por %p359, %p360
      %p362 = scmp.ne.s32.totalorder %s350, %s351
      %p363 = scmp.eq.s32.totalorder %s42, 1
      %p364 = por %p362, %p363
      %p366 = scmp.ne.s32.totalorder %s351, %s365
      %p367 = scmp.eq.s32.totalorder %s42, 0
      %p368 = por %p366, %p367
      %s370 = sadd.s32 %s369, 1
      %p373 = scmp.eq.s32.totalorder %s36, 1
      %p374 = scmp.ne.s32.totalorder %s369, %s371
      %p375 = scmp.eq.s32.totalorder %s36, 0
      %p376 = por %p374, %p375
      %p377 = scmp.ne.s32.totalorder %s369, %s371
      %p378 = scmp.eq.s32.totalorder %s41, 1
      %p379 = por %p377, %p378
      %p380 = scmp.ne.s32.totalorder %s371, %s372
      %p381 = scmp.eq.s32.totalorder %s41, 0
      %p382 = por %p380, %p381
      %p383 = scmp.ne.s32.totalorder %s371, %s372
      %p384 = scmp.eq.s32.totalorder %s42, 1
      %p385 = por %p383, %p384
      %p387 = scmp.ne.s32.totalorder %s372, %s386
      %p388 = scmp.eq.s32.totalorder %s42, 0
      %p389 = por %p387, %p388
      %s391 = sadd.s32 %s390, 1
      %p394 = scmp.eq.s32.totalorder %s36, 1
      %p395 = scmp.ne.s32.totalorder %s390, %s392
      %p396 = scmp.eq.s32.totalorder %s36, 0
      %p397 = por %p395, %p396
      %p398 = scmp.ne.s32.totalorder %s390, %s392
      %p399 = scmp.eq.s32.totalorder %s41, 1
      %p400 = por %p398, %p399
      %p401 = scmp.ne.s32.totalorder %s392, %s393
      %p402 = scmp.eq.s32.totalorder %s41, 0
      %p403 = por %p401, %p402
      %p404 = scmp.ne.s32.totalorder %s392, %s393
      %p405 = scmp.eq.s32.totalorder %s42, 1
      %p406 = por %p404, %p405
      %p408 = scmp.ne.s32.totalorder %s393, %s407
      %p409 = scmp.eq.s32.totalorder %s42, 0
      %p410 = por %p408, %p409
      %s412 = sadd.s32 %s411, 1
      %p415 = scmp.eq.s32.totalorder %s36, 1
      %p416 = scmp.ne.s32.totalorder %s411, %s413
      %p417 = scmp.eq.s32.totalorder %s36, 0
      %p418 = por %p416, %p417
      %p419 = scmp.ne.s32.totalorder %s411, %s413
      %p420 = scmp.eq.s32.totalorder %s41, 1
      %p421 = por %p419, %p420
      %p422 = scmp.ne.s32.totalorder %s413, %s414
      %p423 = scmp.eq.s32.totalorder %s41, 0
      %p424 = por %p422, %p423
      %p425 = scmp.ne.s32.totalorder %s413, %s414
      %p426 = scmp.eq.s32.totalorder %s42, 1
      %p427 = por %p425, %p426
      %p429 = scmp.ne.s32.totalorder %s414, %s428
      %p430 = scmp.eq.s32.totalorder %s42, 0
      %p431 = por %p429, %p430
      %s433 = sadd.s32 %s432, 1
      %p436 = scmp.eq.s32.totalorder %s36, 1
      %p437 = scmp.ne.s32.totalorder %s432, %s434
      %p438 = scmp.eq.s32.totalorder %s36, 0
      %p439 = por %p437, %p438
      %p440 = scmp.ne.s32.totalorder %s432, %s434
      %p441 = scmp.eq.s32.totalorder %s41, 1
      %p442 = por %p440, %p441
      %p443 = scmp.ne.s32.totalorder %s434, %s435
      %p444 = scmp.eq.s32.totalorder %s41, 0
      %p445 = por %p443, %p444
      %p446 = scmp.ne.s32.totalorder %s434, %s435
      %p447 = scmp.eq.s32.totalorder %s42, 1
      %p448 = por %p446, %p447
      %p450 = scmp.ne.s32.totalorder %s435, %s449
      %p451 = scmp.eq.s32.totalorder %s42, 0
      %p452 = por %p450, %p451
      %s454 = sadd.s32 %s453, 1
      %p457 = scmp.eq.s32.totalorder %s36, 1
      %p458 = scmp.ne.s32.totalorder %s453, %s455
      %p459 = scmp.eq.s32.totalorder %s36, 0
      %p460 = por %p458, %p459
      %p461 = scmp.ne.s32.totalorder %s453, %s455
      %p462 = scmp.eq.s32.totalorder %s41, 1
      %p463 = por %p461, %p462
      %p464 = scmp.ne.s32.totalorder %s455, %s456
      %p465 = scmp.eq.s32.totalorder %s41, 0
      %p466 = por %p464, %p465
      %p467 = scmp.ne.s32.totalorder %s455, %s456
      %p468 = scmp.eq.s32.totalorder %s42, 1
      %p469 = por %p467, %p468
      %p471 = scmp.ne.s32.totalorder %s456, %s470
      %p472 = scmp.eq.s32.totalorder %s42, 0
      %p473 = por %p471, %p472
      %s474 = ssub.s32 %s36, %s43
      %p475 = scmp.eq.s32.totalorder %s474, 0
      %s477 = sadd.s32 %s476, 1
      %s478 = scalar_select %p475, %s476, %s477
      %p481 = pneg %p475
      %p482 = scmp.eq.s32.totalorder %s36, 1
      %p483 = por %p481, %p482
      %p484 = scmp.ne.s32.totalorder %s476, %s479
      %p485 = scmp.eq.s32.totalorder %s36, 0
      %p486 = por %p484, %p485
      %p487 = scmp.ne.s32.totalorder %s476, %s479
      %p488 = scmp.eq.s32.totalorder %s41, 1
      %p489 = por %p487, %p488
      %p490 = scmp.ne.s32.totalorder %s479, %s480
      %p491 = scmp.eq.s32.totalorder %s41, 0
      %p492 = por %p490, %p491
      %p493 = scmp.ne.s32.totalorder %s479, %s480
      %p494 = scmp.eq.s32.totalorder %s42, 1
      %p495 = por %p493, %p494
      %p497 = scmp.ne.s32.totalorder %s480, %s496
      %p498 = scmp.eq.s32.totalorder %s42, 0
      %p499 = por %p497, %p498
      %p500 = scmp.le.s32.totalorder 1, %s36
      %p501 = scmp.lt.s32.totalorder %s36, 3
      %p502 = pnand %p500, %p501
      %p503 = pneg %p502
      // Predicated region
      $region9: #{tpu_custom_call.1} parent=5 // pred_check
        _
      $region10: #{tpu_custom_call.1} parent=5 // pred_check_branch
        %505 = sbr.rel (%p502) target = $region12
      $region11: #{tpu_custom_call.1} parent=5 // pred_region
        %s506 = ssub.s32 %s36, 1
        // Predicated region
        $region13: #{tpu_custom_call.1} parent=11 // pred_check
          %p507 = pneg %p109
        $region14: #{tpu_custom_call.1} parent=11 // pred_check_branch
          %509 = sbr.rel (%p507) target = $region16
        $region15: #{tpu_custom_call.1} parent=11 // pred_region
          _
        $region16: #{tpu_custom_call.1} parent=11 // pred_fallthru
          _
        // Predicated region
        $region17: #{tpu_custom_call.1} parent=11 // pred_check
          %p510 = pneg %p130
        $region18: #{tpu_custom_call.1} parent=11 // pred_check_branch
          %512 = sbr.rel (%p510) target = $region20
        $region19: #{tpu_custom_call.1} parent=11 // pred_region
          _
        $region20: #{tpu_custom_call.1} parent=11 // pred_fallthru
          _
        // Predicated region
        $region21: #{tpu_custom_call.1} parent=11 // pred_check
          %p513 = pneg %p151
        $region22: #{tpu_custom_call.1} parent=11 // pred_check_branch
          %515 = sbr.rel (%p513) target = $region24
        $region23: #{tpu_custom_call.1} parent=11 // pred_region
          _
        $region24: #{tpu_custom_call.1} parent=11 // pred_fallthru
          _
        // Predicated region
        $region25: #{tpu_custom_call.1} parent=11 // pred_check
          %p516 = pneg %p172
        $region26: #{tpu_custom_call.1} parent=11 // pred_check_branch
          %518 = sbr.rel (%p516) target = $region28
        $region27: #{tpu_custom_call.1} parent=11 // pred_region
          %s520 = ssub.s32 16, 16
          %521 = vsyncadd [#allocation7], %s520
          %s523 = sshll.u32 [#allocation8], 4
          %s524 = int_to_ptr.vmem [resolvable:$true] %s523
          %526 = dma.hbm_to_vmem [thread:$0]  %s5, 16, %s524, [#allocation7]
        $region28: #{tpu_custom_call.1} parent=11 // pred_fallthru
          _
        // Predicated region
        $region29: #{tpu_custom_call.1} parent=11 // pred_check
          %p527 = pneg %p193
        $region30: #{tpu_custom_call.1} parent=11 // pred_check_branch
          %529 = sbr.rel (%p527) target = $region32
        $region31: #{tpu_custom_call.1} parent=11 // pred_region
          _
        $region32: #{tpu_custom_call.1} parent=11 // pred_fallthru
          _
        // Predicated region
        $region33: #{tpu_custom_call.1} parent=11 // pred_check
          %p530 = pneg %p214
        $region34: #{tpu_custom_call.1} parent=11 // pred_check_branch
          %532 = sbr.rel (%p530) target = $region36
        $region35: #{tpu_custom_call.1} parent=11 // pred_region
          %s534 = ssub.s32 16, 16
          %535 = vsyncadd [#allocation10], %s534
          %s537 = sshll.u32 [#allocation9], 4
          %s538 = int_to_ptr.vmem [resolvable:$true] %s537
          %540 = dma.hbm_to_vmem [thread:$0]  %s7, 16, %s538, [#allocation10]
        $region36: #{tpu_custom_call.1} parent=11 // pred_fallthru
          _
        // Predicated region
        $region37: #{tpu_custom_call.1} parent=11 // pred_check
          %p541 = pneg %p235
        $region38: #{tpu_custom_call.1} parent=11 // pred_check_branch
          %543 = sbr.rel (%p541) target = $region40
        $region39: #{tpu_custom_call.1} parent=11 // pred_region
          _
        $region40: #{tpu_custom_call.1} parent=11 // pred_fallthru
          _
        // Predicated region
        $region41: #{tpu_custom_call.1} parent=11 // pred_check
          %p544 = pneg %p256
        $region42: #{tpu_custom_call.1} parent=11 // pred_check_branch
          %546 = sbr.rel (%p544) target = $region44
        $region43: #{tpu_custom_call.1} parent=11 // pred_region
          _
        $region44: #{tpu_custom_call.1} parent=11 // pred_fallthru
          _
        // Predicated region
        $region45: #{tpu_custom_call.1} parent=11 // pred_check
          %p547 = pneg %p277
        $region46: #{tpu_custom_call.1} parent=11 // pred_check_branch
          %549 = sbr.rel (%p547) target = $region48
        $region47: #{tpu_custom_call.1} parent=11 // pred_region
          _
        $region48: #{tpu_custom_call.1} parent=11 // pred_fallthru
          _
        // Predicated region
        $region49: #{tpu_custom_call.1} parent=11 // pred_check
          %p550 = pneg %p298
        $region50: #{tpu_custom_call.1} parent=11 // pred_check_branch
          %552 = sbr.rel (%p550) target = $region52
        $region51: #{tpu_custom_call.1} parent=11 // pred_region
          _
        $region52: #{tpu_custom_call.1} parent=11 // pred_fallthru
          _
        // Predicated region
        $region53: #{tpu_custom_call.1} parent=11 // pred_check
          %p553 = pneg %p319
        $region54: #{tpu_custom_call.1} parent=11 // pred_check_branch
          %555 = sbr.rel (%p553) target = $region56
        $region55: #{tpu_custom_call.1} parent=11 // pred_region
          _
        $region56: #{tpu_custom_call.1} parent=11 // pred_fallthru
          _
        // Predicated region
        $region57: #{tpu_custom_call.1} parent=11 // pred_check
          %p556 = pneg %p340
        $region58: #{tpu_custom_call.1} parent=11 // pred_check_branch
          %558 = sbr.rel (%p556) target = $region60
        $region59: #{tpu_custom_call.1} parent=11 // pred_region
          _
        $region60: #{tpu_custom_call.1} parent=11 // pred_fallthru
          _
        // Predicated region
        $region61: #{tpu_custom_call.1} parent=11 // pred_check
          %p559 = pneg %p361
        $region62: #{tpu_custom_call.1} parent=11 // pred_check_branch
          %561 = sbr.rel (%p559) target = $region64
        $region63: #{tpu_custom_call.1} parent=11 // pred_region
          _
        $region64: #{tpu_custom_call.1} parent=11 // pred_fallthru
          _
        // Predicated region
        $region65: #{tpu_custom_call.1} parent=11 // pred_check
          %p562 = pneg %p382
        $region66: #{tpu_custom_call.1} parent=11 // pred_check_branch
          %564 = sbr.rel (%p562) target = $region68
        $region67: #{tpu_custom_call.1} parent=11 // pred_region
          _
        $region68: #{tpu_custom_call.1} parent=11 // pred_fallthru
          _
        // Predicated region
        $region69: #{tpu_custom_call.1} parent=11 // pred_check
          %p565 = pneg %p403
        $region70: #{tpu_custom_call.1} parent=11 // pred_check_branch
          %567 = sbr.rel (%p565) target = $region72
        $region71: #{tpu_custom_call.1} parent=11 // pred_region
          %s569 = ssub.s32 4096, 4096
          %570 = vsyncadd [#allocation10], %s569
          %s571 = sshll.u32 [#allocation11], 4
          %s572 = int_to_ptr.vmem [resolvable:$true] %s571
          %577 = dma.hbm_to_vmem [thread:$0]  %s16, 4096, %s572, [#allocation10], 128, 128, 8
        $region72: #{tpu_custom_call.1} parent=11 // pred_fallthru
          _
        // Predicated region
        $region73: #{tpu_custom_call.1} parent=11 // pred_check
          %p578 = pneg %p424
        $region74: #{tpu_custom_call.1} parent=11 // pred_check_branch
          %580 = sbr.rel (%p578) target = $region76
        $region75: #{tpu_custom_call.1} parent=11 // pred_region
          _
        $region76: #{tpu_custom_call.1} parent=11 // pred_fallthru
          _
        // Predicated region
        $region77: #{tpu_custom_call.1} parent=11 // pred_check
          %p581 = pneg %p445
        $region78: #{tpu_custom_call.1} parent=11 // pred_check_branch
          %583 = sbr.rel (%p581) target = $region80
        $region79: #{tpu_custom_call.1} parent=11 // pred_region
          _
        $region80: #{tpu_custom_call.1} parent=11 // pred_fallthru
          _
        // Predicated region
        $region81: #{tpu_custom_call.1} parent=11 // pred_check
          %p584 = pneg %p466
        $region82: #{tpu_custom_call.1} parent=11 // pred_check_branch
          %586 = sbr.rel (%p584) target = $region84
        $region83: #{tpu_custom_call.1} parent=11 // pred_region
          _
        $region84: #{tpu_custom_call.1} parent=11 // pred_fallthru
          _
      $region12: #{tpu_custom_call.1} parent=5 // pred_fallthru
        _
      %p587 = scmp.lt.s32.totalorder %s36, 2
      // Predicated region
      $region85: #{tpu_custom_call.1} parent=5 // pred_check
        %p588 = pneg %p587
      $region86: #{tpu_custom_call.1} parent=5 // pred_check_branch
        %590 = sbr.rel (%p588) target = $region88
      $region87: #{tpu_custom_call.1} parent=5 // pred_region
        // Predicated region
        $region89: #{tpu_custom_call.1} parent=87 // pred_check
          %p591 = pneg %p56
        $region90: #{tpu_custom_call.1} parent=87 // pred_check_branch
          %593 = sbr.rel (%p591) target = $region92
        $region91: #{tpu_custom_call.1} parent=87 // pred_region
          %s594 = sand.u32 %s46, 1
          %s595 = scalar_lea.sflag [#allocation4], %s594
          %s596 = sand.u32 %s46, 1
          %s597 = smul.addr %s596, 4
          %s598 = scalar_lea.vmem [#allocation3], %s597
          %s600 = ssub.s32 64, 64
          %601 = vsyncadd %s595, %s600
          %s602 = smul.addr %s36, 64
          %s603 = scalar_lea.hbm %s0, %s602
          %s605 = sshll.u32 %s598, 4
          %s606 = int_to_ptr.vmem [resolvable:$true] %s605
          %608 = dma.hbm_to_vmem [thread:$0]  %s603, 64, %s606, %s595
        $region92: #{tpu_custom_call.1} parent=87 // pred_fallthru
          _
        // Predicated region
        $region93: #{tpu_custom_call.1} parent=87 // pred_check
          %p609 = pneg %p82
        $region94: #{tpu_custom_call.1} parent=87 // pred_check_branch
          %611 = sbr.rel (%p609) target = $region96
        $region95: #{tpu_custom_call.1} parent=87 // pred_region
          %s612 = sand.u32 %s36, 1
          %s613 = scalar_lea.sflag [#allocation7], %s612
          %s614 = sand.u32 %s72, 1
          %s615 = smul.addr %s614, 4
          %s616 = scalar_lea.vmem [#allocation6], %s615
          %s618 = ssub.s32 64, 64
          %619 = vsyncadd %s613, %s618
          %s620 = smul.addr %s36, 64
          %s621 = scalar_lea.hbm %s1, %s620
          %s623 = sshll.u32 %s616, 4
          %s624 = int_to_ptr.vmem [resolvable:$true] %s623
          %626 = dma.hbm_to_vmem [thread:$0]  %s621, 64, %s624, %s613
        $region96: #{tpu_custom_call.1} parent=87 // pred_fallthru
          _
      $region88: #{tpu_custom_call.1} parent=5 // pred_fallthru
        _
      %p627 = scmp.le.s32.totalorder 1, %s36
      %p628 = scmp.lt.s32.totalorder %s36, 3
      %p629 = pnand %p627, %p628
      %p630 = pneg %p629
      // Predicated region
      $region97: #{tpu_custom_call.1} parent=5 // pred_check
        _
      $region98: #{tpu_custom_call.1} parent=5 // pred_check_branch
        %632 = sbr.rel (%p629) target = $region100
      $region99: #{tpu_custom_call.1} parent=5 // pred_region
        %s633 = ssub.s32 %s36, 1
        %s634 = sand.u32 %s49, 1
        %s635 = scalar_lea.sflag [#allocation4], %s634
        %s636 = sand.u32 %s49, 1
        %s637 = smul.addr %s636, 4
        %s638 = scalar_lea.vmem [#allocation3], %s637
        // Predicated region
        $region101: #{tpu_custom_call.1} parent=99 // pred_check
          %p639 = pneg %p62
        $region102: #{tpu_custom_call.1} parent=99 // pred_check_branch
          %641 = sbr.rel (%p639) target = $region104
        $region103: #{tpu_custom_call.1} parent=99 // pred_region
          %642 = dma.done %s635, 64
        $region104: #{tpu_custom_call.1} parent=99 // pred_fallthru
          _
        %s643 = sand.u32 %s41, 1
        %s644 = scalar_lea.sflag [#allocation7], %s643
        %s645 = sand.u32 %s75, 1
        %s646 = smul.addr %s645, 4
        %s647 = scalar_lea.vmem [#allocation6], %s646
        // Predicated region
        $region105: #{tpu_custom_call.1} parent=99 // pred_check
          %p648 = pneg %p88
        $region106: #{tpu_custom_call.1} parent=99 // pred_check_branch
          %650 = sbr.rel (%p648) target = $region108
        $region107: #{tpu_custom_call.1} parent=99 // pred_region
          %651 = dma.done %s644, 64
        $region108: #{tpu_custom_call.1} parent=99 // pred_fallthru
          _
        // Predicated region
        $region109: #{tpu_custom_call.1} parent=99 // pred_check
          %p652 = pneg %p172
        $region110: #{tpu_custom_call.1} parent=99 // pred_check_branch
          %654 = sbr.rel (%p652) target = $region112
        $region111: #{tpu_custom_call.1} parent=99 // pred_region
          %655 = dma.done [#allocation7], 16
        $region112: #{tpu_custom_call.1} parent=99 // pred_fallthru
          _
        // Predicated region
        $region113: #{tpu_custom_call.1} parent=99 // pred_check
          %p656 = pneg %p214
        $region114: #{tpu_custom_call.1} parent=99 // pred_check_branch
          %658 = sbr.rel (%p656) target = $region116
        $region115: #{tpu_custom_call.1} parent=99 // pred_region
          %659 = dma.done [#allocation10], 16
        $region116: #{tpu_custom_call.1} parent=99 // pred_fallthru
          _
        // Predicated region
        $region117: #{tpu_custom_call.1} parent=99 // pred_check
          %p660 = pneg %p403
        $region118: #{tpu_custom_call.1} parent=99 // pred_check_branch
          %662 = sbr.rel (%p660) target = $region120
        $region119: #{tpu_custom_call.1} parent=99 // pred_region
          %663 = dma.done [#allocation10], 4096
        $region120: #{tpu_custom_call.1} parent=99 // pred_fallthru
          _
        %s664 = sand.u32 %s49, 1
        %s665 = scalar_lea.sflag [#allocation4], %s664
        %s666 = sand.u32 %s49, 1
        %s667 = smul.addr %s666, 4
        %s668 = scalar_lea.vmem [#allocation3], %s667
        %p669 = pneg %p62
        %p670 = pneg %p59
        %s671 = sand.u32 %s41, 1
        %s672 = scalar_lea.sflag [#allocation7], %s671
        %s673 = sand.u32 %s75, 1
        %s674 = smul.addr %s673, 4
        %s675 = scalar_lea.vmem [#allocation6], %s674
        %p676 = pneg %p88
        %p677 = pneg %p85
        %p678 = pneg %p109
        %p679 = pneg %p106
        %p680 = pneg %p130
        %p681 = pneg %p127
        %p682 = pneg %p151
        %p683 = pneg %p148
        %p684 = pneg %p172
        %p685 = pneg %p169
        %p686 = pneg %p193
        %p687 = pneg %p190
        %p688 = pneg %p214
        %p689 = pneg %p211
        %p690 = pneg %p235
        %p691 = pneg %p232
        %p692 = pneg %p256
        %p693 = pneg %p253
        %p694 = pneg %p277
        %p695 = pneg %p274
        %p696 = pneg %p298
        %p697 = pneg %p295
        %p698 = pneg %p319
        %p699 = pneg %p316
        %p700 = pneg %p340
        %p701 = pneg %p337
        %p702 = pneg %p361
        %p703 = pneg %p358
        %p704 = pneg %p382
        %p705 = pneg %p379
        %p706 = pneg %p403
        %p707 = pneg %p400
        %p708 = pneg %p424
        %p709 = pneg %p421
        %p710 = pneg %p445
        %p711 = pneg %p442
        %p712 = pneg %p466
        %p713 = pneg %p463
        %p714 = pneg %p492
        %p715 = pneg %p489
        %s716 = sand.u32 %s479, 1
        %s717 = scalar_lea.sflag [#allocation5], %s716
        %s718 = sand.u32 %s479, 1
        %s719 = scalar_lea.vmem [#allocation12], %s718
        %v720 = vld [vmem:[%s2] sm:$0xf]
        %v721 = vld [vmem:[%s3] sm:$0xf]
        %v722 = vld [vmem:[%s8] sm:$0xff]
        %v723 = vld [vmem:[%s9] sm:$0xff]
        %v724 = vld [vmem:[%s4] sm:$0xff]
        %v725 = vld [vmem:[%s4 + $0x8] sm:$0xff]
        %v726 = vld [vmem:[%s4 + $0x10] sm:$0xff]
        %v727 = vld [vmem:[%s4 + $0x18] sm:$0xff]
        %v728 = vld [vmem:[#allocation8] sm:$0x1]
        %v729 = vld [vmem:[%s6] sm:$0xff]
        %v730 = vld [vmem:[%s6 + $0x8] sm:$0xff]
        %v731 = vld [vmem:[%s6 + $0x10] sm:$0xff]
        %v732 = vld [vmem:[%s6 + $0x18] sm:$0xff]
        %v733 = vld [vmem:[#allocation9] sm:$0x1]
        %v734 = vld [vmem:[%s638] sm:$0xf]
        %736 = vset.pattern.permute.xlu0 0
        %737 = vperm.xlu0 %736, %v720
        %v738 = vpop.permute.xlu0 %737
        %v740 = vmul.f32 %v734, %v738
        %742 = vset.pattern.permute.xlu0 0
        %743 = vperm.xlu0 %742, %v721
        %v744 = vpop.permute.xlu0 %743
        %v746 = vadd.f32 %v740, %v744
        %v748 = vlaneseq
        %v749 = vshrl.u32 %v748, 7
        %v750 = vsub.s32 0, %v749
        %v751 = vrot.slane %v728, %v750
        %vm753 = vcmask 261120
        %v755 = vsel %vm753, %v746, 0
        %757 = vmatprep.subr.mxu0 0.0
        %758 = vmatpush1.msra.mxu0 0.0
        %759 = vmatprep.subr.mxu0 0.0
        %760 = vmatpush1.msra.mxu0 0.0
        %761 = vmatprep.subr.mxu0 0.0
        %762 = vmatpush1.msra.mxu0 0.0
        %763 = vmatprep.subr.mxu0 0.0
        %764 = vmatpush1.msra.mxu0 0.0
        %765 = vmatprep.subr.mxu0 0.0
        %766 = vmatpush1.msra.mxu0 0.0
        %767 = vmatprep.subr.mxu0 0.0
        %768 = vmatpush1.msra.mxu0 0.0
        %769 = vmatprep.subr.mxu0 0.0
        %770 = vmatpush1.msra.mxu0 0.0
        %771 = vmatprep.subr.mxu0 0.0
        %772 = vmatpush1.msra.mxu0 0.0
        %773 = vmatprep.subr.mxu0 0.0
        %774 = vmatpush1.msra.mxu0 0.0
        %775 = vmatprep.subr.mxu0 0.0
        %776 = vmatpush1.msra.mxu0 0.0
        %777 = vmatprep.subr.mxu0 0.0
        %778 = vmatpush1.msra.mxu0 0.0
        %779 = vmatprep.subr.mxu0 0.0
        %780 = vmatpush1.msra.mxu0 0.0
        %781 = vmatprep.subr.mxu0 0.0
        %782 = vmatpush1.msra.mxu0 %v727
        %783 = vmatprep.subr.mxu0 0.0
        %784 = vmatpush1.msra.mxu0 %v726
        %785 = vmatprep.subr.mxu0 0.0
        %786 = vmatpush1.msra.mxu0 %v725
        %787 = vmatprep.subr.mxu0 0.0
        %788 = vmatpush1.msra.mxu0 %v724
        %789 = vmatprep.subr.mxu0 0.0
        %790 = vmatpush2.msra.mxu0 0.0
        %791 = vmatprep.subr.mxu0 0.0
        %792 = vmatpush2.msra.mxu0 0.0
        %793 = vmatprep.subr.mxu0 0.0
        %794 = vmatpush2.msra.mxu0 0.0
        %795 = vmatprep.subr.mxu0 0.0
        %796 = vmatpush2.msra.mxu0 0.0
        %797 = vmatprep.subr.mxu0 0.0
        %798 = vmatpush2.msra.mxu0 0.0
        %799 = vmatprep.subr.mxu0 0.0
        %800 = vmatpush2.msra.mxu0 0.0
        %801 = vmatprep.subr.mxu0 0.0
        %802 = vmatpush2.msra.mxu0 0.0
        %803 = vmatprep.subr.mxu0 0.0
        %804 = vmatpush2.msra.mxu0 0.0
        %805 = vmatprep.subr.mxu0 0.0
        %806 = vmatpush2.msra.mxu0 0.0
        %807 = vmatprep.subr.mxu0 0.0
        %808 = vmatpush2.msra.mxu0 0.0
        %809 = vmatprep.subr.mxu0 0.0
        %810 = vmatpush2.msra.mxu0 0.0
        %811 = vmatprep.subr.mxu0 0.0
        %812 = vmatpush2.msra.mxu0 0.0
        %813 = vmatprep.subr.mxu0 0.0
        %814 = vmatpush2.msra.mxu0 0.0
        %815 = vmatprep.subr.mxu0 0.0
        %816 = vmatpush2.msra.mxu0 0.0
        %817 = vmatprep.subr.mxu0 0.0
        %818 = vmatpush2.msra.mxu0 0.0
        %819 = vmatprep.subr.mxu0 0.0
        %820 = vmatpush2.msra.mxu0 0.0
        %821 = vmatprep.mubr.f32.mxu0 0.0
        %822 = vmatmul.mubr.f32.gmra.mxu0 %v755
        %v823 = vpop.f32.mrf.mxu0
        %v824 = vadd.f32 %v751, %v823
        %v825 = vpop.f32.mrf.mxu0
        %826 = vdwg.mxu0
        %v827 = vmax.f32 %v824, 0.0
        %v829 = vlaneseq
        %v830 = vshrl.u32 %v829, 7
        %v831 = vsub.s32 0, %v830
        %v832 = vrot.slane %v733, %v831
        %v835 = vsel %vm753, %v827, 0
        %837 = vmatprep.subr.mxu0 0.0
        %838 = vmatpush1.msra.mxu0 0.0
        %839 = vmatprep.subr.mxu0 0.0
        %840 = vmatpush1.msra.mxu0 0.0
        %841 = vmatprep.subr.mxu0 0.0
        %842 = vmatpush1.msra.mxu0 0.0
        %843 = vmatprep.subr.mxu0 0.0
        %844 = vmatpush1.msra.mxu0 0.0
        %845 = vmatprep.subr.mxu0 0.0
        %846 = vmatpush1.msra.mxu0 0.0
        %847 = vmatprep.subr.mxu0 0.0
        %848 = vmatpush1.msra.mxu0 0.0
        %849 = vmatprep.subr.mxu0 0.0
        %850 = vmatpush1.msra.mxu0 0.0
        %851 = vmatprep.subr.mxu0 0.0
        %852 = vmatpush1.msra.mxu0 0.0
        %853 = vmatprep.subr.mxu0 0.0
        %854 = vmatpush1.msra.mxu0 0.0
        %855 = vmatprep.subr.mxu0 0.0
        %856 = vmatpush1.msra.mxu0 0.0
        %857 = vmatprep.subr.mxu0 0.0
        %858 = vmatpush1.msra.mxu0 0.0
        %859 = vmatprep.subr.mxu0 0.0
        %860 = vmatpush1.msra.mxu0 0.0
        %861 = vmatprep.subr.mxu0 0.0
        %862 = vmatpush1.msra.mxu0 %v732
        %863 = vmatprep.subr.mxu0 0.0
        %864 = vmatpush1.msra.mxu0 %v731
        %865 = vmatprep.subr.mxu0 0.0
        %866 = vmatpush1.msra.mxu0 %v730
        %867 = vmatprep.subr.mxu0 0.0
        %868 = vmatpush1.msra.mxu0 %v729
        %869 = vmatprep.subr.mxu0 0.0
        %870 = vmatpush2.msra.mxu0 0.0
        %871 = vmatprep.subr.mxu0 0.0
        %872 = vmatpush2.msra.mxu0 0.0
        %873 = vmatprep.subr.mxu0 0.0
        %874 = vmatpush2.msra.mxu0 0.0
        %875 = vmatprep.subr.mxu0 0.0
        %876 = vmatpush2.msra.mxu0 0.0
        %877 = vmatprep.subr.mxu0 0.0
        %878 = vmatpush2.msra.mxu0 0.0
        %879 = vmatprep.subr.mxu0 0.0
        %880 = vmatpush2.msra.mxu0 0.0
        %881 = vmatprep.subr.mxu0 0.0
        %882 = vmatpush2.msra.mxu0 0.0
        %883 = vmatprep.subr.mxu0 0.0
        %884 = vmatpush2.msra.mxu0 0.0
        %885 = vmatprep.subr.mxu0 0.0
        %886 = vmatpush2.msra.mxu0 0.0
        %887 = vmatprep.subr.mxu0 0.0
        %888 = vmatpush2.msra.mxu0 0.0
        %889 = vmatprep.subr.mxu0 0.0
        %890 = vmatpush2.msra.mxu0 0.0
        %891 = vmatprep.subr.mxu0 0.0
        %892 = vmatpush2.msra.mxu0 0.0
        %893 = vmatprep.subr.mxu0 0.0
        %894 = vmatpush2.msra.mxu0 0.0
        %895 = vmatprep.subr.mxu0 0.0
        %896 = vmatpush2.msra.mxu0 0.0
        %897 = vmatprep.subr.mxu0 0.0
        %898 = vmatpush2.msra.mxu0 0.0
        %899 = vmatprep.subr.mxu0 0.0
        %900 = vmatpush2.msra.mxu0 0.0
        %901 = vmatprep.mubr.f32.mxu0 0.0
        %902 = vmatmul.mubr.f32.gmra.mxu0 %v835
        %v903 = vpop.f32.mrf.mxu0
        %v904 = vadd.f32 %v832, %v903
        %v905 = vpop.f32.mrf.mxu0
        %906 = vdwg.mxu0
        %908 = vset.pattern.permute.xlu0 0
        %909 = vperm.xlu0 %908, %v722
        %v910 = vpop.permute.xlu0 %909
        %v912 = vmul.f32 %v904, %v910
        %914 = vset.pattern.permute.xlu0 0
        %915 = vperm.xlu0 %914, %v723
        %v916 = vpop.permute.xlu0 %915
        %v918 = vadd.f32 %v912, %v916
        %vm919 = vcmask 257024
        %920 = vst.msk [vmem:[#allocation2] sm:$0xf] %vm919, %v918
        %v921 = vld [vmem:[%s647] sm:$0xf]
        %v922 = vrot.slane %v910, 4
        %v924 = vmul.f32 %v921, %v922
        %v925 = vrot.slane %v916, 4
        %v927 = vadd.f32 %v924, %v925
        %928 = vst.msk [vmem:[#allocation2 + $0x4] sm:$0xf] %vm919, %v927
        %v929 = vld [vmem:[#allocation2] sm:$0xff]
        %v930 = vld [vmem:[%s10] sm:$0xff]
        %v931 = vld [vmem:[%s10 + $0x8] sm:$0xff]
        %v932 = vld [vmem:[%s10 + $0x10] sm:$0xff]
        %v933 = vld [vmem:[%s10 + $0x18] sm:$0xff]
        %v934 = vld [vmem:[%s11] sm:$0xff]
        %v935 = vld [vmem:[%s11 + $0x8] sm:$0xff]
        %v936 = vld [vmem:[%s11 + $0x10] sm:$0xff]
        %v937 = vld [vmem:[%s11 + $0x18] sm:$0xff]
        %939 = vset.pattern.permute.xlu0 0
        %940 = vperm.xlu0 %939, %v934
        %v941 = vpop.permute.xlu0 %940
        %944 = vset.pattern.permute.xlu0 0
        %945 = vperm.xlu0 %944, %v935
        %v946 = vpop.permute.xlu0 %945
        %949 = vset.pattern.permute.xlu0 0
        %950 = vperm.xlu0 %949, %v936
        %v951 = vpop.permute.xlu0 %950
        %954 = vset.pattern.permute.xlu0 0
        %955 = vperm.xlu0 %954, %v937
        %v956 = vpop.permute.xlu0 %955
        %vm958 = vcmask 64512
        %v960 = vsel %vm958, %v930, 0
        %v963 = vsel %vm958, %v931, 0
        %v966 = vsel %vm958, %v932, 0
        %v969 = vsel %vm958, %v933, 0
        %971 = vmatprep.subr.mxu0 0.0
        %972 = vmatpush1.msra.mxu0 0.0
        %973 = vmatprep.subr.mxu0 0.0
        %974 = vmatpush1.msra.mxu0 0.0
        %975 = vmatprep.subr.mxu0 0.0
        %976 = vmatpush1.msra.mxu0 0.0
        %977 = vmatprep.subr.mxu0 0.0
        %978 = vmatpush1.msra.mxu0 0.0
        %979 = vmatprep.subr.mxu0 0.0
        %980 = vmatpush1.msra.mxu0 0.0
        %981 = vmatprep.subr.mxu0 0.0
        %982 = vmatpush1.msra.mxu0 0.0
        %983 = vmatprep.subr.mxu0 0.0
        %984 = vmatpush1.msra.mxu0 0.0
        %985 = vmatprep.subr.mxu0 0.0
        %986 = vmatpush1.msra.mxu0 0.0
        %987 = vmatprep.subr.mxu0 0.0
        %988 = vmatpush1.msra.mxu0 0.0
        %989 = vmatprep.subr.mxu0 0.0
        %990 = vmatpush1.msra.mxu0 0.0
        %991 = vmatprep.subr.mxu0 0.0
        %992 = vmatpush1.msra.mxu0 0.0
        %993 = vmatprep.subr.mxu0 0.0
        %994 = vmatpush1.msra.mxu0 0.0
        %995 = vmatprep.subr.mxu0 0.0
        %996 = vmatpush1.msra.mxu0 0.0
        %997 = vmatprep.subr.mxu0 0.0
        %998 = vmatpush1.msra.mxu0 0.0
        %999 = vmatprep.subr.mxu0 0.0
        %1000 = vmatpush1.msra.mxu0 0.0
        %1001 = vmatprep.subr.mxu0 0.0
        %1002 = vmatpush1.msra.mxu0 %v929
        %1003 = vmatprep.subr.mxu0 0.0
        %1004 = vmatpush2.msra.mxu0 0.0
        %1005 = vmatprep.subr.mxu0 0.0
        %1006 = vmatpush2.msra.mxu0 0.0
        %1007 = vmatprep.subr.mxu0 0.0
        %1008 = vmatpush2.msra.mxu0 0.0
        %1009 = vmatprep.subr.mxu0 0.0
        %1010 = vmatpush2.msra.mxu0 0.0
        %1011 = vmatprep.subr.mxu0 0.0
        %1012 = vmatpush2.msra.mxu0 0.0
        %1013 = vmatprep.subr.mxu0 0.0
        %1014 = vmatpush2.msra.mxu0 0.0
        %1015 = vmatprep.subr.mxu0 0.0
        %1016 = vmatpush2.msra.mxu0 0.0
        %1017 = vmatprep.subr.mxu0 0.0
        %1018 = vmatpush2.msra.mxu0 0.0
        %1019 = vmatprep.subr.mxu0 0.0
        %1020 = vmatpush2.msra.mxu0 0.0
        %1021 = vmatprep.subr.mxu0 0.0
        %1022 = vmatpush2.msra.mxu0 0.0
        %1023 = vmatprep.subr.mxu0 0.0
        %1024 = vmatpush2.msra.mxu0 0.0
        %1025 = vmatprep.subr.mxu0 0.0
        %1026 = vmatpush2.msra.mxu0 0.0
        %1027 = vmatprep.subr.mxu0 0.0
        %1028 = vmatpush2.msra.mxu0 0.0
        %1029 = vmatprep.subr.mxu0 0.0
        %1030 = vmatpush2.msra.mxu0 0.0
        %1031 = vmatprep.subr.mxu0 0.0
        %1032 = vmatpush2.msra.mxu0 0.0
        %1033 = vmatprep.subr.mxu0 0.0
        %1034 = vmatpush2.msra.mxu0 0.0
        %1035 = vmatprep.mubr.f32.mxu0 0.0
        %1036 = vmatmul.mubr.f32.gmra.mxu0 %v960
        %v1037 = vpop.f32.mrf.mxu0
        %v1038 = vadd.f32 %v941, %v1037
        %v1039 = vpop.f32.mrf.mxu0
        %1040 = vmatprep.mubr.f32.mxu0 0.0
        %1041 = vmatmul.mubr.f32.gmra.mxu0 %v963
        %v1042 = vpop.f32.mrf.mxu0
        %v1043 = vadd.f32 %v946, %v1042
        %v1044 = vpop.f32.mrf.mxu0
        %1045 = vmatprep.mubr.f32.mxu0 0.0
        %1046 = vmatmul.mubr.f32.gmra.mxu0 %v966
        %v1047 = vpop.f32.mrf.mxu0
        %v1048 = vadd.f32 %v951, %v1047
        %v1049 = vpop.f32.mrf.mxu0
        %1050 = vmatprep.mubr.f32.mxu0 0.0
        %1051 = vmatmul.mubr.f32.gmra.mxu0 %v969
        %v1052 = vpop.f32.mrf.mxu0
        %v1053 = vadd.f32 %v956, %v1052
        %v1054 = vpop.f32.mrf.mxu0
        %1055 = vdwg.mxu0
        %v1056 = vmax.f32 %v1038, 0.0
        %v1057 = vmax.f32 %v1043, 0.0
        %v1058 = vmax.f32 %v1048, 0.0
        %v1059 = vmax.f32 %v1053, 0.0
        %v1060 = vld [vmem:[%s12] sm:$0xff]
        %v1061 = vld [vmem:[%s13] sm:$0xff]
        %1063 = vset.pattern.permute.xlu0 0
        %1064 = vperm.xlu0 %1063, %v1061
        %v1065 = vpop.permute.xlu0 %1064
        %v1068 = vsel %vm753, %v1060, 0
        %1070 = vmatprep.subr.mxu0 0.0
        %1071 = vmatpush1.msra.mxu0 0.0
        %1072 = vmatprep.subr.mxu0 0.0
        %1073 = vmatpush1.msra.mxu0 0.0
        %1074 = vmatprep.subr.mxu0 0.0
        %1075 = vmatpush1.msra.mxu0 0.0
        %1076 = vmatprep.subr.mxu0 0.0
        %1077 = vmatpush1.msra.mxu0 0.0
        %1078 = vmatprep.subr.mxu0 0.0
        %1079 = vmatpush1.msra.mxu0 0.0
        %1080 = vmatprep.subr.mxu0 0.0
        %1081 = vmatpush1.msra.mxu0 0.0
        %1082 = vmatprep.subr.mxu0 0.0
        %1083 = vmatpush1.msra.mxu0 0.0
        %1084 = vmatprep.subr.mxu0 0.0
        %1085 = vmatpush1.msra.mxu0 0.0
        %1086 = vmatprep.subr.mxu0 0.0
        %1087 = vmatpush1.msra.mxu0 0.0
        %1088 = vmatprep.subr.mxu0 0.0
        %1089 = vmatpush1.msra.mxu0 0.0
        %1090 = vmatprep.subr.mxu0 0.0
        %1091 = vmatpush1.msra.mxu0 0.0
        %1092 = vmatprep.subr.mxu0 0.0
        %1093 = vmatpush1.msra.mxu0 0.0
        %1094 = vmatprep.subr.mxu0 0.0
        %1095 = vmatpush1.msra.mxu0 %v1059
        %1096 = vmatprep.subr.mxu0 0.0
        %1097 = vmatpush1.msra.mxu0 %v1058
        %1098 = vmatprep.subr.mxu0 0.0
        %1099 = vmatpush1.msra.mxu0 %v1057
        %1100 = vmatprep.subr.mxu0 0.0
        %1101 = vmatpush1.msra.mxu0 %v1056
        %1102 = vmatprep.subr.mxu0 0.0
        %1103 = vmatpush2.msra.mxu0 0.0
        %1104 = vmatprep.subr.mxu0 0.0
        %1105 = vmatpush2.msra.mxu0 0.0
        %1106 = vmatprep.subr.mxu0 0.0
        %1107 = vmatpush2.msra.mxu0 0.0
        %1108 = vmatprep.subr.mxu0 0.0
        %1109 = vmatpush2.msra.mxu0 0.0
        %1110 = vmatprep.subr.mxu0 0.0
        %1111 = vmatpush2.msra.mxu0 0.0
        %1112 = vmatprep.subr.mxu0 0.0
        %1113 = vmatpush2.msra.mxu0 0.0
        %1114 = vmatprep.subr.mxu0 0.0
        %1115 = vmatpush2.msra.mxu0 0.0
        %1116 = vmatprep.subr.mxu0 0.0
        %1117 = vmatpush2.msra.mxu0 0.0
        %1118 = vmatprep.subr.mxu0 0.0
        %1119 = vmatpush2.msra.mxu0 0.0
        %1120 = vmatprep.subr.mxu0 0.0
        %1121 = vmatpush2.msra.mxu0 0.0
        %1122 = vmatprep.subr.mxu0 0.0
        %1123 = vmatpush2.msra.mxu0 0.0
        %1124 = vmatprep.subr.mxu0 0.0
        %1125 = vmatpush2.msra.mxu0 0.0
        %1126 = vmatprep.subr.mxu0 0.0
        %1127 = vmatpush2.msra.mxu0 0.0
        %1128 = vmatprep.subr.mxu0 0.0
        %1129 = vmatpush2.msra.mxu0 0.0
        %1130 = vmatprep.subr.mxu0 0.0
        %1131 = vmatpush2.msra.mxu0 0.0
        %1132 = vmatprep.subr.mxu0 0.0
        %1133 = vmatpush2.msra.mxu0 0.0
        %1134 = vmatprep.mubr.f32.mxu0 0.0
        %1135 = vmatmul.mubr.f32.gmra.mxu0 %v1068
        %v1136 = vpop.f32.mrf.mxu0
        %v1137 = vadd.f32 %v1065, %v1136
        %v1138 = vpop.f32.mrf.mxu0
        %1139 = vdwg.mxu0
        %v1140 = vadd.f32 %v929, %v1137
        %v1141 = vld [vmem:[%s14] sm:$0xff]
        %v1142 = vld [vmem:[%s15] sm:$0xff]
        %v1143 = vsel %vm753, %v1140, 0.0
        %1144 = vadd.xlane.f32.xlu0 %v1143
        %v1145 = vpop.xlane.xlu0 %1144
        %v1146 = vrot.slane %v1145, 4
        %v1147 = vadd.f32 %v1145, %v1146
        %v1148 = vrot.slane %v1147, 2
        %v1149 = vadd.f32 %v1147, %v1148
        %v1150 = vrot.slane %v1149, 1
        %v1151 = vadd.f32 %v1149, %v1150
        %s1152 = vtos %v1151
        %v1153 = vstv %s1152
        %v1154 = vrcp.pop 256.0
        %v1155 = vmul.f32 %v1153, %v1154
        %v1156 = vsub.f32 %v1140, %v1155
        %v1157 = vmul.f32 %v1156, %v1156
        %v1158 = vsel %vm753, %v1157, 0.0
        %1159 = vadd.xlane.f32.xlu0 %v1158
        %v1160 = vpop.xlane.xlu0 %1159
        %v1161 = vrot.slane %v1160, 4
        %v1162 = vadd.f32 %v1160, %v1161
        %v1163 = vrot.slane %v1162, 2
        %v1164 = vadd.f32 %v1162, %v1163
        %v1165 = vrot.slane %v1164, 1
        %v1166 = vadd.f32 %v1164, %v1165
        %s1167 = vtos %v1166
        %v1168 = vstv %s1167
        %v1169 = vmul.f32 %v1168, %v1154
        %v1170 = vadd.f32 %v1169, 1e-05
        %v1171 = vrsqrt.pop %v1170
        %v1172 = vmul.f32 %v1156, %v1171
        %v1173 = vmul.f32 %v1172, %v1141
        %v1174 = vadd.f32 %v1173, %v1142
        %v1175 = vmul.f32 %v1174, 0.5
        %v1176 = vmul.f32 %v1174, 0.044715
        %v1177 = vmul.f32 %v1176, %v1174
        %v1178 = vmul.f32 %v1177, %v1174
        %v1179 = vadd.f32 %v1174, %v1178
        %v1180 = vmul.f32 %v1179, 0.7978846
        %v1181 = vtanh.pop %v1180
        %v1182 = vadd.f32 %v1181, 1.0
        %v1183 = vmul.f32 %v1175, %v1182
        %v1184 = vld [vmem:[#allocation11] sm:$0xff]
        %v1185 = vld [vmem:[#allocation11 + $0x8] sm:$0xff]
        %v1186 = vld [vmem:[#allocation11 + $0x10] sm:$0xff]
        %v1187 = vld [vmem:[#allocation11 + $0x18] sm:$0xff]
        %s1188 = scalar_lea.vmem [#allocation11], 32
        %v1189 = vld [vmem:[%s1188] sm:$0xff]
        %v1190 = vld [vmem:[%s1188 + $0x8] sm:$0xff]
        %v1191 = vld [vmem:[%s1188 + $0x10] sm:$0xff]
        %v1192 = vld [vmem:[%s1188 + $0x18] sm:$0xff]
        %v1194 = vrot.slane %v1183, 1
        %v1195 = vsel %vm753, %v1194, 0
        %1197 = vmatprep.subr.mxu0 0.0
        %1198 = vmatpush1.msra.mxu0 0.0
        %1199 = vmatprep.subr.mxu0 0.0
        %1200 = vmatpush1.msra.mxu0 0.0
        %1201 = vmatprep.subr.mxu0 0.0
        %1202 = vmatpush1.msra.mxu0 0.0
        %1203 = vmatprep.subr.mxu0 0.0
        %1204 = vmatpush1.msra.mxu0 0.0
        %1205 = vmatprep.subr.mxu0 0.0
        %1206 = vmatpush1.msra.mxu0 0.0
        %1207 = vmatprep.subr.mxu0 0.0
        %1208 = vmatpush1.msra.mxu0 0.0
        %1209 = vmatprep.subr.mxu0 0.0
        %1210 = vmatpush1.msra.mxu0 0.0
        %1211 = vmatprep.subr.mxu0 0.0
        %1212 = vmatpush1.msra.mxu0 0.0
        %1213 = vmatprep.subr.mxu0 0.0
        %1214 = vmatpush1.msra.mxu0 0.0
        %1215 = vmatprep.subr.mxu0 0.0
        %1216 = vmatpush1.msra.mxu0 0.0
        %1217 = vmatprep.subr.mxu0 0.0
        %1218 = vmatpush1.msra.mxu0 0.0
        %1219 = vmatprep.subr.mxu0 0.0
        %1220 = vmatpush1.msra.mxu0 0.0
        %1221 = vmatprep.subr.mxu0 0.0
        %1222 = vmatpush1.msra.mxu0 %v1192
        %1223 = vmatprep.subr.mxu0 0.0
        %1224 = vmatpush1.msra.mxu0 %v1191
        %1225 = vmatprep.subr.mxu0 0.0
        %1226 = vmatpush1.msra.mxu0 %v1190
        %1227 = vmatprep.subr.mxu0 0.0
        %1228 = vmatpush1.msra.mxu0 %v1189
        %1229 = vmatprep.subr.mxu0 0.0
        %1230 = vmatpush2.msra.mxu0 0.0
        %1231 = vmatprep.subr.mxu0 0.0
        %1232 = vmatpush2.msra.mxu0 0.0
        %1233 = vmatprep.subr.mxu0 0.0
        %1234 = vmatpush2.msra.mxu0 0.0
        %1235 = vmatprep.subr.mxu0 0.0
        %1236 = vmatpush2.msra.mxu0 0.0
        %1237 = vmatprep.subr.mxu0 0.0
        %1238 = vmatpush2.msra.mxu0 0.0
        %1239 = vmatprep.subr.mxu0 0.0
        %1240 = vmatpush2.msra.mxu0 0.0
        %1241 = vmatprep.subr.mxu0 0.0
        %1242 = vmatpush2.msra.mxu0 0.0
        %1243 = vmatprep.subr.mxu0 0.0
        %1244 = vmatpush2.msra.mxu0 0.0
        %1245 = vmatprep.subr.mxu0 0.0
        %1246 = vmatpush2.msra.mxu0 0.0
        %1247 = vmatprep.subr.mxu0 0.0
        %1248 = vmatpush2.msra.mxu0 0.0
        %1249 = vmatprep.subr.mxu0 0.0
        %1250 = vmatpush2.msra.mxu0 0.0
        %1251 = vmatprep.subr.mxu0 0.0
        %1252 = vmatpush2.msra.mxu0 0.0
        %1253 = vmatprep.subr.mxu0 0.0
        %1254 = vmatpush2.msra.mxu0 0.0
        %1255 = vmatprep.subr.mxu0 0.0
        %1256 = vmatpush2.msra.mxu0 0.0
        %1257 = vmatprep.subr.mxu0 0.0
        %1258 = vmatpush2.msra.mxu0 0.0
        %1259 = vmatprep.subr.mxu0 0.0
        %1260 = vmatpush2.msra.mxu0 0.0
        %1261 = vmatprep.mubr.f32.mxu0 0.0
        %1262 = vmatmul.mubr.f32.gmra.mxu0 %v1195
        %v1263 = vpop.f32.mrf.mxu0
        %v1264 = vadd.f32 0.0, %v1263
        %v1265 = vpop.f32.mrf.mxu0
        %1266 = vdwg.mxu0
        %v1267 = vsel %vm753, %v1183, 0
        %1269 = vmatprep.subr.mxu0 0.0
        %1270 = vmatpush1.msra.mxu0 0.0
        %1271 = vmatprep.subr.mxu0 0.0
        %1272 = vmatpush1.msra.mxu0 0.0
        %1273 = vmatprep.subr.mxu0 0.0
        %1274 = vmatpush1.msra.mxu0 0.0
        %1275 = vmatprep.subr.mxu0 0.0
        %1276 = vmatpush1.msra.mxu0 0.0
        %1277 = vmatprep.subr.mxu0 0.0
        %1278 = vmatpush1.msra.mxu0 0.0
        %1279 = vmatprep.subr.mxu0 0.0
        %1280 = vmatpush1.msra.mxu0 0.0
        %1281 = vmatprep.subr.mxu0 0.0
        %1282 = vmatpush1.msra.mxu0 0.0
        %1283 = vmatprep.subr.mxu0 0.0
        %1284 = vmatpush1.msra.mxu0 0.0
        %1285 = vmatprep.subr.mxu0 0.0
        %1286 = vmatpush1.msra.mxu0 0.0
        %1287 = vmatprep.subr.mxu0 0.0
        %1288 = vmatpush1.msra.mxu0 0.0
        %1289 = vmatprep.subr.mxu0 0.0
        %1290 = vmatpush1.msra.mxu0 0.0
        %1291 = vmatprep.subr.mxu0 0.0
        %1292 = vmatpush1.msra.mxu0 0.0
        %1293 = vmatprep.subr.mxu0 0.0
        %1294 = vmatpush1.msra.mxu0 %v1187
        %1295 = vmatprep.subr.mxu0 0.0
        %1296 = vmatpush1.msra.mxu0 %v1186
        %1297 = vmatprep.subr.mxu0 0.0
        %1298 = vmatpush1.msra.mxu0 %v1185
        %1299 = vmatprep.subr.mxu0 0.0
        %1300 = vmatpush1.msra.mxu0 %v1184
        %1301 = vmatprep.subr.mxu0 0.0
        %1302 = vmatpush2.msra.mxu0 0.0
        %1303 = vmatprep.subr.mxu0 0.0
        %1304 = vmatpush2.msra.mxu0 0.0
        %1305 = vmatprep.subr.mxu0 0.0
        %1306 = vmatpush2.msra.mxu0 0.0
        %1307 = vmatprep.subr.mxu0 0.0
        %1308 = vmatpush2.msra.mxu0 0.0
        %1309 = vmatprep.subr.mxu0 0.0
        %1310 = vmatpush2.msra.mxu0 0.0
        %1311 = vmatprep.subr.mxu0 0.0
        %1312 = vmatpush2.msra.mxu0 0.0
        %1313 = vmatprep.subr.mxu0 0.0
        %1314 = vmatpush2.msra.mxu0 0.0
        %1315 = vmatprep.subr.mxu0 0.0
        %1316 = vmatpush2.msra.mxu0 0.0
        %1317 = vmatprep.subr.mxu0 0.0
        %1318 = vmatpush2.msra.mxu0 0.0
        %1319 = vmatprep.subr.mxu0 0.0
        %1320 = vmatpush2.msra.mxu0 0.0
        %1321 = vmatprep.subr.mxu0 0.0
        %1322 = vmatpush2.msra.mxu0 0.0
        %1323 = vmatprep.subr.mxu0 0.0
        %1324 = vmatpush2.msra.mxu0 0.0
        %1325 = vmatprep.subr.mxu0 0.0
        %1326 = vmatpush2.msra.mxu0 0.0
        %1327 = vmatprep.subr.mxu0 0.0
        %1328 = vmatpush2.msra.mxu0 0.0
        %1329 = vmatprep.subr.mxu0 0.0
        %1330 = vmatpush2.msra.mxu0 0.0
        %1331 = vmatprep.subr.mxu0 0.0
        %1332 = vmatpush2.msra.mxu0 0.0
        %1333 = vmatprep.mubr.f32.mxu0 0.0
        %1334 = vmatmul.mubr.f32.gmra.mxu0 %v1267
        %v1335 = vpop.f32.mrf.mxu0
        %v1336 = vadd.f32 %v1264, %v1335
        %v1337 = vpop.f32.mrf.mxu0
        %1338 = vdwg.mxu0
        %s1339 = scalar_lea.vmem [#allocation11], 64
        %v1340 = vld [vmem:[%s1339] sm:$0xff]
        %v1341 = vld [vmem:[%s1339 + $0x8] sm:$0xff]
        %v1342 = vld [vmem:[%s1339 + $0x10] sm:$0xff]
        %v1343 = vld [vmem:[%s1339 + $0x18] sm:$0xff]
        %v1344 = vrot.slane %v1183, 2
        %v1345 = vsel %vm753, %v1344, 0
        %1347 = vmatprep.subr.mxu0 0.0
        %1348 = vmatpush1.msra.mxu0 0.0
        %1349 = vmatprep.subr.mxu0 0.0
        %1350 = vmatpush1.msra.mxu0 0.0
        %1351 = vmatprep.subr.mxu0 0.0
        %1352 = vmatpush1.msra.mxu0 0.0
        %1353 = vmatprep.subr.mxu0 0.0
        %1354 = vmatpush1.msra.mxu0 0.0
        %1355 = vmatprep.subr.mxu0 0.0
        %1356 = vmatpush1.msra.mxu0 0.0
        %1357 = vmatprep.subr.mxu0 0.0
        %1358 = vmatpush1.msra.mxu0 0.0
        %1359 = vmatprep.subr.mxu0 0.0
        %1360 = vmatpush1.msra.mxu0 0.0
        %1361 = vmatprep.subr.mxu0 0.0
        %1362 = vmatpush1.msra.mxu0 0.0
        %1363 = vmatprep.subr.mxu0 0.0
        %1364 = vmatpush1.msra.mxu0 0.0
        %1365 = vmatprep.subr.mxu0 0.0
        %1366 = vmatpush1.msra.mxu0 0.0
        %1367 = vmatprep.subr.mxu0 0.0
        %1368 = vmatpush1.msra.mxu0 0.0
        %1369 = vmatprep.subr.mxu0 0.0
        %1370 = vmatpush1.msra.mxu0 0.0
        %1371 = vmatprep.subr.mxu0 0.0
        %1372 = vmatpush1.msra.mxu0 %v1343
        %1373 = vmatprep.subr.mxu0 0.0
        %1374 = vmatpush1.msra.mxu0 %v1342
        %1375 = vmatprep.subr.mxu0 0.0
        %1376 = vmatpush1.msra.mxu0 %v1341
        %1377 = vmatprep.subr.mxu0 0.0
        %1378 = vmatpush1.msra.mxu0 %v1340
        %1379 = vmatprep.subr.mxu0 0.0
        %1380 = vmatpush2.msra.mxu0 0.0
        %1381 = vmatprep.subr.mxu0 0.0
        %1382 = vmatpush2.msra.mxu0 0.0
        %1383 = vmatprep.subr.mxu0 0.0
        %1384 = vmatpush2.msra.mxu0 0.0
        %1385 = vmatprep.subr.mxu0 0.0
        %1386 = vmatpush2.msra.mxu0 0.0
        %1387 = vmatprep.subr.mxu0 0.0
        %1388 = vmatpush2.msra.mxu0 0.0
        %1389 = vmatprep.subr.mxu0 0.0
        %1390 = vmatpush2.msra.mxu0 0.0
        %1391 = vmatprep.subr.mxu0 0.0
        %1392 = vmatpush2.msra.mxu0 0.0
        %1393 = vmatprep.subr.mxu0 0.0
        %1394 = vmatpush2.msra.mxu0 0.0
        %1395 = vmatprep.subr.mxu0 0.0
        %1396 = vmatpush2.msra.mxu0 0.0
        %1397 = vmatprep.subr.mxu0 0.0
        %1398 = vmatpush2.msra.mxu0 0.0
        %1399 = vmatprep.subr.mxu0 0.0
        %1400 = vmatpush2.msra.mxu0 0.0
        %1401 = vmatprep.subr.mxu0 0.0
        %1402 = vmatpush2.msra.mxu0 0.0
        %1403 = vmatprep.subr.mxu0 0.0
        %1404 = vmatpush2.msra.mxu0 0.0
        %1405 = vmatprep.subr.mxu0 0.0
        %1406 = vmatpush2.msra.mxu0 0.0
        %1407 = vmatprep.subr.mxu0 0.0
        %1408 = vmatpush2.msra.mxu0 0.0
        %1409 = vmatprep.subr.mxu0 0.0
        %1410 = vmatpush2.msra.mxu0 0.0
        %1411 = vmatprep.mubr.f32.mxu0 0.0
        %1412 = vmatmul.mubr.f32.gmra.mxu0 %v1345
        %v1413 = vpop.f32.mrf.mxu0
        %v1414 = vadd.f32 0.0, %v1413
        %v1415 = vpop.f32.mrf.mxu0
        %1416 = vdwg.mxu0
        %v1417 = vadd.f32 %v1336, %v1414
        %s1418 = scalar_lea.vmem [#allocation11], 96
        %v1419 = vld [vmem:[%s1418] sm:$0xff]
        %v1420 = vld [vmem:[%s1418 + $0x8] sm:$0xff]
        %v1421 = vld [vmem:[%s1418 + $0x10] sm:$0xff]
        %v1422 = vld [vmem:[%s1418 + $0x18] sm:$0xff]
        %v1423 = vrot.slane %v1183, 3
        %v1424 = vsel %vm753, %v1423, 0
        %1426 = vmatprep.subr.mxu0 0.0
        %1427 = vmatpush1.msra.mxu0 0.0
        %1428 = vmatprep.subr.mxu0 0.0
        %1429 = vmatpush1.msra.mxu0 0.0
        %1430 = vmatprep.subr.mxu0 0.0
        %1431 = vmatpush1.msra.mxu0 0.0
        %1432 = vmatprep.subr.mxu0 0.0
        %1433 = vmatpush1.msra.mxu0 0.0
        %1434 = vmatprep.subr.mxu0 0.0
        %1435 = vmatpush1.msra.mxu0 0.0
        %1436 = vmatprep.subr.mxu0 0.0
        %1437 = vmatpush1.msra.mxu0 0.0
        %1438 = vmatprep.subr.mxu0 0.0
        %1439 = vmatpush1.msra.mxu0 0.0
        %1440 = vmatprep.subr.mxu0 0.0
        %1441 = vmatpush1.msra.mxu0 0.0
        %1442 = vmatprep.subr.mxu0 0.0
        %1443 = vmatpush1.msra.mxu0 0.0
        %1444 = vmatprep.subr.mxu0 0.0
        %1445 = vmatpush1.msra.mxu0 0.0
        %1446 = vmatprep.subr.mxu0 0.0
        %1447 = vmatpush1.msra.mxu0 0.0
        %1448 = vmatprep.subr.mxu0 0.0
        %1449 = vmatpush1.msra.mxu0 0.0
        %1450 = vmatprep.subr.mxu0 0.0
        %1451 = vmatpush1.msra.mxu0 %v1422
        %1452 = vmatprep.subr.mxu0 0.0
        %1453 = vmatpush1.msra.mxu0 %v1421
        %1454 = vmatprep.subr.mxu0 0.0
        %1455 = vmatpush1.msra.mxu0 %v1420
        %1456 = vmatprep.subr.mxu0 0.0
        %1457 = vmatpush1.msra.mxu0 %v1419
        %1458 = vmatprep.subr.mxu0 0.0
        %1459 = vmatpush2.msra.mxu0 0.0
        %1460 = vmatprep.subr.mxu0 0.0
        %1461 = vmatpush2.msra.mxu0 0.0
        %1462 = vmatprep.subr.mxu0 0.0
        %1463 = vmatpush2.msra.mxu0 0.0
        %1464 = vmatprep.subr.mxu0 0.0
        %1465 = vmatpush2.msra.mxu0 0.0
        %1466 = vmatprep.subr.mxu0 0.0
        %1467 = vmatpush2.msra.mxu0 0.0
        %1468 = vmatprep.subr.mxu0 0.0
        %1469 = vmatpush2.msra.mxu0 0.0
        %1470 = vmatprep.subr.mxu0 0.0
        %1471 = vmatpush2.msra.mxu0 0.0
        %1472 = vmatprep.subr.mxu0 0.0
        %1473 = vmatpush2.msra.mxu0 0.0
        %1474 = vmatprep.subr.mxu0 0.0
        %1475 = vmatpush2.msra.mxu0 0.0
        %1476 = vmatprep.subr.mxu0 0.0
        %1477 = vmatpush2.msra.mxu0 0.0
        %1478 = vmatprep.subr.mxu0 0.0
        %1479 = vmatpush2.msra.mxu0 0.0
        %1480 = vmatprep.subr.mxu0 0.0
        %1481 = vmatpush2.msra.mxu0 0.0
        %1482 = vmatprep.subr.mxu0 0.0
        %1483 = vmatpush2.msra.mxu0 0.0
        %1484 = vmatprep.subr.mxu0 0.0
        %1485 = vmatpush2.msra.mxu0 0.0
        %1486 = vmatprep.subr.mxu0 0.0
        %1487 = vmatpush2.msra.mxu0 0.0
        %1488 = vmatprep.subr.mxu0 0.0
        %1489 = vmatpush2.msra.mxu0 0.0
        %1490 = vmatprep.mubr.f32.mxu0 0.0
        %1491 = vmatmul.mubr.f32.gmra.mxu0 %v1424
        %v1492 = vpop.f32.mrf.mxu0
        %v1493 = vadd.f32 0.0, %v1492
        %v1494 = vpop.f32.mrf.mxu0
        %1495 = vdwg.mxu0
        %v1496 = vadd.f32 %v1417, %v1493
        %s1497 = scalar_lea.vmem [#allocation11], 128
        %v1498 = vld [vmem:[%s1497] sm:$0xff]
        %v1499 = vld [vmem:[%s1497 + $0x8] sm:$0xff]
        %v1500 = vld [vmem:[%s1497 + $0x10] sm:$0xff]
        %v1501 = vld [vmem:[%s1497 + $0x18] sm:$0xff]
        %v1502 = vrot.slane %v1183, 4
        %v1503 = vsel %vm753, %v1502, 0
        %1505 = vmatprep.subr.mxu0 0.0
        %1506 = vmatpush1.msra.mxu0 0.0
        %1507 = vmatprep.subr.mxu0 0.0
        %1508 = vmatpush1.msra.mxu0 0.0
        %1509 = vmatprep.subr.mxu0 0.0
        %1510 = vmatpush1.msra.mxu0 0.0
        %1511 = vmatprep.subr.mxu0 0.0
        %1512 = vmatpush1.msra.mxu0 0.0
        %1513 = vmatprep.subr.mxu0 0.0
        %1514 = vmatpush1.msra.mxu0 0.0
        %1515 = vmatprep.subr.mxu0 0.0
        %1516 = vmatpush1.msra.mxu0 0.0
        %1517 = vmatprep.subr.mxu0 0.0
        %1518 = vmatpush1.msra.mxu0 0.0
        %1519 = vmatprep.subr.mxu0 0.0
        %1520 = vmatpush1.msra.mxu0 0.0
        %1521 = vmatprep.subr.mxu0 0.0
        %1522 = vmatpush1.msra.mxu0 0.0
        %1523 = vmatprep.subr.mxu0 0.0
        %1524 = vmatpush1.msra.mxu0 0.0
        %1525 = vmatprep.subr.mxu0 0.0
        %1526 = vmatpush1.msra.mxu0 0.0
        %1527 = vmatprep.subr.mxu0 0.0
        %1528 = vmatpush1.msra.mxu0 0.0
        %1529 = vmatprep.subr.mxu0 0.0
        %1530 = vmatpush1.msra.mxu0 %v1501
        %1531 = vmatprep.subr.mxu0 0.0
        %1532 = vmatpush1.msra.mxu0 %v1500
        %1533 = vmatprep.subr.mxu0 0.0
        %1534 = vmatpush1.msra.mxu0 %v1499
        %1535 = vmatprep.subr.mxu0 0.0
        %1536 = vmatpush1.msra.mxu0 %v1498
        %1537 = vmatprep.subr.mxu0 0.0
        %1538 = vmatpush2.msra.mxu0 0.0
        %1539 = vmatprep.subr.mxu0 0.0
        %1540 = vmatpush2.msra.mxu0 0.0
        %1541 = vmatprep.subr.mxu0 0.0
        %1542 = vmatpush2.msra.mxu0 0.0
        %1543 = vmatprep.subr.mxu0 0.0
        %1544 = vmatpush2.msra.mxu0 0.0
        %1545 = vmatprep.subr.mxu0 0.0
        %1546 = vmatpush2.msra.mxu0 0.0
        %1547 = vmatprep.subr.mxu0 0.0
        %1548 = vmatpush2.msra.mxu0 0.0
        %1549 = vmatprep.subr.mxu0 0.0
        %1550 = vmatpush2.msra.mxu0 0.0
        %1551 = vmatprep.subr.mxu0 0.0
        %1552 = vmatpush2.msra.mxu0 0.0
        %1553 = vmatprep.subr.mxu0 0.0
        %1554 = vmatpush2.msra.mxu0 0.0
        %1555 = vmatprep.subr.mxu0 0.0
        %1556 = vmatpush2.msra.mxu0 0.0
        %1557 = vmatprep.subr.mxu0 0.0
        %1558 = vmatpush2.msra.mxu0 0.0
        %1559 = vmatprep.subr.mxu0 0.0
        %1560 = vmatpush2.msra.mxu0 0.0
        %1561 = vmatprep.subr.mxu0 0.0
        %1562 = vmatpush2.msra.mxu0 0.0
        %1563 = vmatprep.subr.mxu0 0.0
        %1564 = vmatpush2.msra.mxu0 0.0
        %1565 = vmatprep.subr.mxu0 0.0
        %1566 = vmatpush2.msra.mxu0 0.0
        %1567 = vmatprep.subr.mxu0 0.0
        %1568 = vmatpush2.msra.mxu0 0.0
        %1569 = vmatprep.mubr.f32.mxu0 0.0
        %1570 = vmatmul.mubr.f32.gmra.mxu0 %v1503
        %v1571 = vpop.f32.mrf.mxu0
        %v1572 = vadd.f32 0.0, %v1571
        %v1573 = vpop.f32.mrf.mxu0
        %1574 = vdwg.mxu0
        %v1575 = vadd.f32 %v1496, %v1572
        %s1576 = scalar_lea.vmem [#allocation11], 160
        %v1577 = vld [vmem:[%s1576] sm:$0xff]
        %v1578 = vld [vmem:[%s1576 + $0x8] sm:$0xff]
        %v1579 = vld [vmem:[%s1576 + $0x10] sm:$0xff]
        %v1580 = vld [vmem:[%s1576 + $0x18] sm:$0xff]
        %v1581 = vrot.slane %v1183, 5
        %v1582 = vsel %vm753, %v1581, 0
        %1584 = vmatprep.subr.mxu0 0.0
        %1585 = vmatpush1.msra.mxu0 0.0
        %1586 = vmatprep.subr.mxu0 0.0
        %1587 = vmatpush1.msra.mxu0 0.0
        %1588 = vmatprep.subr.mxu0 0.0
        %1589 = vmatpush1.msra.mxu0 0.0
        %1590 = vmatprep.subr.mxu0 0.0
        %1591 = vmatpush1.msra.mxu0 0.0
        %1592 = vmatprep.subr.mxu0 0.0
        %1593 = vmatpush1.msra.mxu0 0.0
        %1594 = vmatprep.subr.mxu0 0.0
        %1595 = vmatpush1.msra.mxu0 0.0
        %1596 = vmatprep.subr.mxu0 0.0
        %1597 = vmatpush1.msra.mxu0 0.0
        %1598 = vmatprep.subr.mxu0 0.0
        %1599 = vmatpush1.msra.mxu0 0.0
        %1600 = vmatprep.subr.mxu0 0.0
        %1601 = vmatpush1.msra.mxu0 0.0
        %1602 = vmatprep.subr.mxu0 0.0
        %1603 = vmatpush1.msra.mxu0 0.0
        %1604 = vmatprep.subr.mxu0 0.0
        %1605 = vmatpush1.msra.mxu0 0.0
        %1606 = vmatprep.subr.mxu0 0.0
        %1607 = vmatpush1.msra.mxu0 0.0
        %1608 = vmatprep.subr.mxu0 0.0
        %1609 = vmatpush1.msra.mxu0 %v1580
        %1610 = vmatprep.subr.mxu0 0.0
        %1611 = vmatpush1.msra.mxu0 %v1579
        %1612 = vmatprep.subr.mxu0 0.0
        %1613 = vmatpush1.msra.mxu0 %v1578
        %1614 = vmatprep.subr.mxu0 0.0
        %1615 = vmatpush1.msra.mxu0 %v1577
        %1616 = vmatprep.subr.mxu0 0.0
        %1617 = vmatpush2.msra.mxu0 0.0
        %1618 = vmatprep.subr.mxu0 0.0
        %1619 = vmatpush2.msra.mxu0 0.0
        %1620 = vmatprep.subr.mxu0 0.0
        %1621 = vmatpush2.msra.mxu0 0.0
        %1622 = vmatprep.subr.mxu0 0.0
        %1623 = vmatpush2.msra.mxu0 0.0
        %1624 = vmatprep.subr.mxu0 0.0
        %1625 = vmatpush2.msra.mxu0 0.0
        %1626 = vmatprep.subr.mxu0 0.0
        %1627 = vmatpush2.msra.mxu0 0.0
        %1628 = vmatprep.subr.mxu0 0.0
        %1629 = vmatpush2.msra.mxu0 0.0
        %1630 = vmatprep.subr.mxu0 0.0
        %1631 = vmatpush2.msra.mxu0 0.0
        %1632 = vmatprep.subr.mxu0 0.0
        %1633 = vmatpush2.msra.mxu0 0.0
        %1634 = vmatprep.subr.mxu0 0.0
        %1635 = vmatpush2.msra.mxu0 0.0
        %1636 = vmatprep.subr.mxu0 0.0
        %1637 = vmatpush2.msra.mxu0 0.0
        %1638 = vmatprep.subr.mxu0 0.0
        %1639 = vmatpush2.msra.mxu0 0.0
        %1640 = vmatprep.subr.mxu0 0.0
        %1641 = vmatpush2.msra.mxu0 0.0
        %1642 = vmatprep.subr.mxu0 0.0
        %1643 = vmatpush2.msra.mxu0 0.0
        %1644 = vmatprep.subr.mxu0 0.0
        %1645 = vmatpush2.msra.mxu0 0.0
        %1646 = vmatprep.subr.mxu0 0.0
        %1647 = vmatpush2.msra.mxu0 0.0
        %1648 = vmatprep.mubr.f32.mxu0 0.0
        %1649 = vmatmul.mubr.f32.gmra.mxu0 %v1582
        %v1650 = vpop.f32.mrf.mxu0
        %v1651 = vadd.f32 0.0, %v1650
        %v1652 = vpop.f32.mrf.mxu0
        %1653 = vdwg.mxu0
        %v1654 = vadd.f32 %v1575, %v1651
        %s1655 = scalar_lea.vmem [#allocation11], 192
        %v1656 = vld [vmem:[%s1655] sm:$0xff]
        %v1657 = vld [vmem:[%s1655 + $0x8] sm:$0xff]
        %v1658 = vld [vmem:[%s1655 + $0x10] sm:$0xff]
        %v1659 = vld [vmem:[%s1655 + $0x18] sm:$0xff]
        %v1660 = vrot.slane %v1183, 6
        %v1661 = vsel %vm753, %v1660, 0
        %1663 = vmatprep.subr.mxu0 0.0
        %1664 = vmatpush1.msra.mxu0 0.0
        %1665 = vmatprep.subr.mxu0 0.0
        %1666 = vmatpush1.msra.mxu0 0.0
        %1667 = vmatprep.subr.mxu0 0.0
        %1668 = vmatpush1.msra.mxu0 0.0
        %1669 = vmatprep.subr.mxu0 0.0
        %1670 = vmatpush1.msra.mxu0 0.0
        %1671 = vmatprep.subr.mxu0 0.0
        %1672 = vmatpush1.msra.mxu0 0.0
        %1673 = vmatprep.subr.mxu0 0.0
        %1674 = vmatpush1.msra.mxu0 0.0
        %1675 = vmatprep.subr.mxu0 0.0
        %1676 = vmatpush1.msra.mxu0 0.0
        %1677 = vmatprep.subr.mxu0 0.0
        %1678 = vmatpush1.msra.mxu0 0.0
        %1679 = vmatprep.subr.mxu0 0.0
        %1680 = vmatpush1.msra.mxu0 0.0
        %1681 = vmatprep.subr.mxu0 0.0
        %1682 = vmatpush1.msra.mxu0 0.0
        %1683 = vmatprep.subr.mxu0 0.0
        %1684 = vmatpush1.msra.mxu0 0.0
        %1685 = vmatprep.subr.mxu0 0.0
        %1686 = vmatpush1.msra.mxu0 0.0
        %1687 = vmatprep.subr.mxu0 0.0
        %1688 = vmatpush1.msra.mxu0 %v1659
        %1689 = vmatprep.subr.mxu0 0.0
        %1690 = vmatpush1.msra.mxu0 %v1658
        %1691 = vmatprep.subr.mxu0 0.0
        %1692 = vmatpush1.msra.mxu0 %v1657
        %1693 = vmatprep.subr.mxu0 0.0
        %1694 = vmatpush1.msra.mxu0 %v1656
        %1695 = vmatprep.subr.mxu0 0.0
        %1696 = vmatpush2.msra.mxu0 0.0
        %1697 = vmatprep.subr.mxu0 0.0
        %1698 = vmatpush2.msra.mxu0 0.0
        %1699 = vmatprep.subr.mxu0 0.0
        %1700 = vmatpush2.msra.mxu0 0.0
        %1701 = vmatprep.subr.mxu0 0.0
        %1702 = vmatpush2.msra.mxu0 0.0
        %1703 = vmatprep.subr.mxu0 0.0
        %1704 = vmatpush2.msra.mxu0 0.0
        %1705 = vmatprep.subr.mxu0 0.0
        %1706 = vmatpush2.msra.mxu0 0.0
        %1707 = vmatprep.subr.mxu0 0.0
        %1708 = vmatpush2.msra.mxu0 0.0
        %1709 = vmatprep.subr.mxu0 0.0
        %1710 = vmatpush2.msra.mxu0 0.0
        %1711 = vmatprep.subr.mxu0 0.0
        %1712 = vmatpush2.msra.mxu0 0.0
        %1713 = vmatprep.subr.mxu0 0.0
        %1714 = vmatpush2.msra.mxu0 0.0
        %1715 = vmatprep.subr.mxu0 0.0
        %1716 = vmatpush2.msra.mxu0 0.0
        %1717 = vmatprep.subr.mxu0 0.0
        %1718 = vmatpush2.msra.mxu0 0.0
        %1719 = vmatprep.subr.mxu0 0.0
        %1720 = vmatpush2.msra.mxu0 0.0
        %1721 = vmatprep.subr.mxu0 0.0
        %1722 = vmatpush2.msra.mxu0 0.0
        %1723 = vmatprep.subr.mxu0 0.0
        %1724 = vmatpush2.msra.mxu0 0.0
        %1725 = vmatprep.subr.mxu0 0.0
        %1726 = vmatpush2.msra.mxu0 0.0
        %1727 = vmatprep.mubr.f32.mxu0 0.0
        %1728 = vmatmul.mubr.f32.gmra.mxu0 %v1661
        %v1729 = vpop.f32.mrf.mxu0
        %v1730 = vadd.f32 0.0, %v1729
        %v1731 = vpop.f32.mrf.mxu0
        %1732 = vdwg.mxu0
        %v1733 = vadd.f32 %v1654, %v1730
        %s1734 = scalar_lea.vmem [#allocation11], 224
        %v1735 = vld [vmem:[%s1734] sm:$0xff]
        %v1736 = vld [vmem:[%s1734 + $0x8] sm:$0xff]
        %v1737 = vld [vmem:[%s1734 + $0x10] sm:$0xff]
        %v1738 = vld [vmem:[%s1734 + $0x18] sm:$0xff]
        %v1739 = vrot.slane %v1183, 7
        %v1740 = vsel %vm753, %v1739, 0
        %1742 = vmatprep.subr.mxu0 0.0
        %1743 = vmatpush1.msra.mxu0 0.0
        %1744 = vmatprep.subr.mxu0 0.0
        %1745 = vmatpush1.msra.mxu0 0.0
        %1746 = vmatprep.subr.mxu0 0.0
        %1747 = vmatpush1.msra.mxu0 0.0
        %1748 = vmatprep.subr.mxu0 0.0
        %1749 = vmatpush1.msra.mxu0 0.0
        %1750 = vmatprep.subr.mxu0 0.0
        %1751 = vmatpush1.msra.mxu0 0.0
        %1752 = vmatprep.subr.mxu0 0.0
        %1753 = vmatpush1.msra.mxu0 0.0
        %1754 = vmatprep.subr.mxu0 0.0
        %1755 = vmatpush1.msra.mxu0 0.0
        %1756 = vmatprep.subr.mxu0 0.0
        %1757 = vmatpush1.msra.mxu0 0.0
        %1758 = vmatprep.subr.mxu0 0.0
        %1759 = vmatpush1.msra.mxu0 0.0
        %1760 = vmatprep.subr.mxu0 0.0
        %1761 = vmatpush1.msra.mxu0 0.0
        %1762 = vmatprep.subr.mxu0 0.0
        %1763 = vmatpush1.msra.mxu0 0.0
        %1764 = vmatprep.subr.mxu0 0.0
        %1765 = vmatpush1.msra.mxu0 0.0
        %1766 = vmatprep.subr.mxu0 0.0
        %1767 = vmatpush1.msra.mxu0 %v1738
        %1768 = vmatprep.subr.mxu0 0.0
        %1769 = vmatpush1.msra.mxu0 %v1737
        %1770 = vmatprep.subr.mxu0 0.0
        %1771 = vmatpush1.msra.mxu0 %v1736
        %1772 = vmatprep.subr.mxu0 0.0
        %1773 = vmatpush1.msra.mxu0 %v1735
        %1774 = vmatprep.subr.mxu0 0.0
        %1775 = vmatpush2.msra.mxu0 0.0
        %1776 = vmatprep.subr.mxu0 0.0
        %1777 = vmatpush2.msra.mxu0 0.0
        %1778 = vmatprep.subr.mxu0 0.0
        %1779 = vmatpush2.msra.mxu0 0.0
        %1780 = vmatprep.subr.mxu0 0.0
        %1781 = vmatpush2.msra.mxu0 0.0
        %1782 = vmatprep.subr.mxu0 0.0
        %1783 = vmatpush2.msra.mxu0 0.0
        %1784 = vmatprep.subr.mxu0 0.0
        %1785 = vmatpush2.msra.mxu0 0.0
        %1786 = vmatprep.subr.mxu0 0.0
        %1787 = vmatpush2.msra.mxu0 0.0
        %1788 = vmatprep.subr.mxu0 0.0
        %1789 = vmatpush2.msra.mxu0 0.0
        %1790 = vmatprep.subr.mxu0 0.0
        %1791 = vmatpush2.msra.mxu0 0.0
        %1792 = vmatprep.subr.mxu0 0.0
        %1793 = vmatpush2.msra.mxu0 0.0
        %1794 = vmatprep.subr.mxu0 0.0
        %1795 = vmatpush2.msra.mxu0 0.0
        %1796 = vmatprep.subr.mxu0 0.0
        %1797 = vmatpush2.msra.mxu0 0.0
        %1798 = vmatprep.subr.mxu0 0.0
        %1799 = vmatpush2.msra.mxu0 0.0
        %1800 = vmatprep.subr.mxu0 0.0
        %1801 = vmatpush2.msra.mxu0 0.0
        %1802 = vmatprep.subr.mxu0 0.0
        %1803 = vmatpush2.msra.mxu0 0.0
        %1804 = vmatprep.subr.mxu0 0.0
        %1805 = vmatpush2.msra.mxu0 0.0
        %1806 = vmatprep.mubr.f32.mxu0 0.0
        %1807 = vmatmul.mubr.f32.gmra.mxu0 %v1740
        %v1808 = vpop.f32.mrf.mxu0
        %v1809 = vadd.f32 0.0, %v1808
        %v1810 = vpop.f32.mrf.mxu0
        %1811 = vdwg.mxu0
        %v1812 = vadd.f32 %v1733, %v1809
        %v1813 = vld [vmem:[%s17] sm:$0x1]
        %v1814 = vadd.f32 %v1812, %v1813
        %v1815 = vmul.f32 %v1814, 0.5
        %v1816 = vmul.f32 %v1814, 0.044715
        %v1817 = vmul.f32 %v1816, %v1814
        %v1818 = vmul.f32 %v1817, %v1814
        %v1819 = vadd.f32 %v1814, %v1818
        %v1820 = vmul.f32 %v1819, 0.7978846
        %v1821 = vtanh.pop %v1820
        %v1822 = vadd.f32 %v1821, 1.0
        %v1823 = vmul.f32 %v1815, %v1822
        %v1824 = vld [vmem:[%s18] sm:$0xff]
        %v1825 = vld [vmem:[%s18 + $0x8] sm:$0xff]
        %v1826 = vld [vmem:[%s18 + $0x10] sm:$0xff]
        %v1827 = vld [vmem:[%s18 + $0x18] sm:$0xff]
        %v1828 = vld [vmem:[%s19] sm:$0x1]
        %v1830 = vsel %vm753, %v1823, 0
        %1832 = vmatprep.subr.mxu0 0.0
        %1833 = vmatpush1.msra.mxu0 0.0
        %1834 = vmatprep.subr.mxu0 0.0
        %1835 = vmatpush1.msra.mxu0 0.0
        %1836 = vmatprep.subr.mxu0 0.0
        %1837 = vmatpush1.msra.mxu0 0.0
        %1838 = vmatprep.subr.mxu0 0.0
        %1839 = vmatpush1.msra.mxu0 0.0
        %1840 = vmatprep.subr.mxu0 0.0
        %1841 = vmatpush1.msra.mxu0 0.0
        %1842 = vmatprep.subr.mxu0 0.0
        %1843 = vmatpush1.msra.mxu0 0.0
        %1844 = vmatprep.subr.mxu0 0.0
        %1845 = vmatpush1.msra.mxu0 0.0
        %1846 = vmatprep.subr.mxu0 0.0
        %1847 = vmatpush1.msra.mxu0 0.0
        %1848 = vmatprep.subr.mxu0 0.0
        %1849 = vmatpush1.msra.mxu0 0.0
        %1850 = vmatprep.subr.mxu0 0.0
        %1851 = vmatpush1.msra.mxu0 0.0
        %1852 = vmatprep.subr.mxu0 0.0
        %1853 = vmatpush1.msra.mxu0 0.0
        %1854 = vmatprep.subr.mxu0 0.0
        %1855 = vmatpush1.msra.mxu0 0.0
        %1856 = vmatprep.subr.mxu0 0.0
        %1857 = vmatpush1.msra.mxu0 %v1827
        %1858 = vmatprep.subr.mxu0 0.0
        %1859 = vmatpush1.msra.mxu0 %v1826
        %1860 = vmatprep.subr.mxu0 0.0
        %1861 = vmatpush1.msra.mxu0 %v1825
        %1862 = vmatprep.subr.mxu0 0.0
        %1863 = vmatpush1.msra.mxu0 %v1824
        %1864 = vmatprep.subr.mxu0 0.0
        %1865 = vmatpush2.msra.mxu0 0.0
        %1866 = vmatprep.subr.mxu0 0.0
        %1867 = vmatpush2.msra.mxu0 0.0
        %1868 = vmatprep.subr.mxu0 0.0
        %1869 = vmatpush2.msra.mxu0 0.0
        %1870 = vmatprep.subr.mxu0 0.0
        %1871 = vmatpush2.msra.mxu0 0.0
        %1872 = vmatprep.subr.mxu0 0.0
        %1873 = vmatpush2.msra.mxu0 0.0
        %1874 = vmatprep.subr.mxu0 0.0
        %1875 = vmatpush2.msra.mxu0 0.0
        %1876 = vmatprep.subr.mxu0 0.0
        %1877 = vmatpush2.msra.mxu0 0.0
        %1878 = vmatprep.subr.mxu0 0.0
        %1879 = vmatpush2.msra.mxu0 0.0
        %1880 = vmatprep.subr.mxu0 0.0
        %1881 = vmatpush2.msra.mxu0 0.0
        %1882 = vmatprep.subr.mxu0 0.0
        %1883 = vmatpush2.msra.mxu0 0.0
        %1884 = vmatprep.subr.mxu0 0.0
        %1885 = vmatpush2.msra.mxu0 0.0
        %1886 = vmatprep.subr.mxu0 0.0
        %1887 = vmatpush2.msra.mxu0 0.0
        %1888 = vmatprep.subr.mxu0 0.0
        %1889 = vmatpush2.msra.mxu0 0.0
        %1890 = vmatprep.subr.mxu0 0.0
        %1891 = vmatpush2.msra.mxu0 0.0
        %1892 = vmatprep.subr.mxu0 0.0
        %1893 = vmatpush2.msra.mxu0 0.0
        %1894 = vmatprep.subr.mxu0 0.0
        %1895 = vmatpush2.msra.mxu0 0.0
        %1896 = vmatprep.mubr.f32.mxu0 0.0
        %1897 = vmatmul.mubr.f32.gmra.mxu0 %v1830
        %v1898 = vpop.f32.mrf.mxu0
        %v1899 = vadd.f32 %v1828, %v1898
        %v1900 = vpop.f32.mrf.mxu0
        %1901 = vdwg.mxu0
        %1902 = vst [vmem:[%s719] sm:$0x1] %v1899
        %s1903 = sand.u32 %s479, 1
        %s1904 = scalar_lea.sflag [#allocation5], %s1903
        %s1905 = sand.u32 %s479, 1
        %s1906 = scalar_lea.vmem [#allocation12], %s1905
        // Predicated region
        $region121: #{tpu_custom_call.1} parent=99 // pred_check
          %p1907 = pneg %p489
        $region122: #{tpu_custom_call.1} parent=99 // pred_check_branch
          %1909 = sbr.rel (%p1907) target = $region124
        $region123: #{tpu_custom_call.1} parent=99 // pred_region
          %s1911 = ssub.s32 16, 16
          %1912 = vsyncadd %s1904, %s1911
          %s1913 = smul.addr %s41, 16
          %s1914 = scalar_lea.hbm %s20, %s1913
          %s1916 = sshll.u32 %s1906, 4
          %s1917 = int_to_ptr.vmem [resolvable:$true] %s1916
          %1919 = dma.vmem_to_hbm [thread:$0]  %s1917, 16, %s1914, %s1904
        $region124: #{tpu_custom_call.1} parent=99 // pred_fallthru
          _
      $region100: #{tpu_custom_call.1} parent=5 // pred_fallthru
        _
      %p1920 = scmp.le.s32.totalorder 2, %s36
      // Predicated region
      $region125: #{tpu_custom_call.1} parent=5 // pred_check
        %p1921 = pneg %p1920
      $region126: #{tpu_custom_call.1} parent=5 // pred_check_branch
        %1923 = sbr.rel (%p1921) target = $region128
      $region127: #{tpu_custom_call.1} parent=5 // pred_region
        %s1924 = ssub.s32 %s36, 2
        // Predicated region
        $region129: #{tpu_custom_call.1} parent=127 // pred_check
          %p1925 = pneg %p495
        $region130: #{tpu_custom_call.1} parent=127 // pred_check_branch
          %1927 = sbr.rel (%p1925) target = $region132
        $region131: #{tpu_custom_call.1} parent=127 // pred_region
          %s1928 = sand.u32 %s480, 1
          %s1929 = scalar_lea.sflag [#allocation5], %s1928
          %s1930 = sand.u32 %s480, 1
          %s1931 = scalar_lea.vmem [#allocation12], %s1930
          %1932 = dma.done %s1929, 16
        $region132: #{tpu_custom_call.1} parent=127 // pred_fallthru
          _
      $region128: #{tpu_custom_call.1} parent=5 // pred_fallthru
        _
    $region6: #{tpu_custom_call.1} parent=1 // loop_footer
      %s40 = sadd.s32 1, %s36
    $region7: #{tpu_custom_call.1} parent=1 // loop_footer_branch
      %35 = sbr.rel target = $region3
    $region8: #{tpu_custom_call.1} parent=1 // loop_exit
      _
    %1933 = vsyncpa [#allocation4], 1
    %s1934 = scalar_lea.sflag [#allocation4], 1
    %1935 = vsyncpa %s1934, 1
    %1936 = vsyncpa [#allocation7], 1
    %s1937 = scalar_lea.sflag [#allocation7], 1
    %1938 = vsyncpa %s1937, 1
    %1939 = vsyncpa [#allocation10], 1
    %1940 = vsyncpa [#allocation5], 1
    %s1941 = scalar_lea.sflag [#allocation5], 1
    %1942 = vsyncpa %s1941, 1

</llo_original>
